<compile_context>
chip_gen: v6e
topology: v6e:2x2x1
jax: 0.10.0
libtpu: 0.0.40
codegen_flags: <defaults>
</compile_context>

<pallas_src>
import functools

import jax
import jax.numpy as jnp
from jax.experimental import pallas as pl
from jax.experimental.pallas import tpu as pltpu


def msa_kernel(x_ref, wq_ref, wk_ref, wv_ref, bias_ref, wout_ref, bout_ref,
               y_ref, *, heads, dim_head):
    bt, n, d_model = x_ref.shape
    x2 = x_ref[...].reshape(bt * n, d_model)          # (Bt*N, D), bf16

    acc = jnp.zeros((bt * n, d_model), jnp.float32)   # fused output accumulator
    for h in range(heads):                            # small static loop
        # Per-head projections: full Bt*N rows on the MXU, no column slicing.
        # (softmax scale is already folded into wq in the wrapper)
        q = jnp.dot(x2, wq_ref[h], preferred_element_type=jnp.float32)
        k = jnp.dot(x2, wk_ref[h], preferred_element_type=jnp.float32)
        v = jnp.dot(x2, wv_ref[h], preferred_element_type=jnp.float32)
        q3 = q.reshape(bt, n, dim_head).astype(jnp.bfloat16)
        k3 = k.reshape(bt, n, dim_head).astype(jnp.bfloat16)
        v3 = v.reshape(bt, n, dim_head).astype(jnp.bfloat16)

        # Scores batched over the batch-tile axis; contraction over d of both
        # operands -> no explicit transpose of k.
        s = jnp.einsum('bqd,bkd->bqk', q3, k3,
                       preferred_element_type=jnp.float32)      # (Bt, N, N) f32
        s = s + bias_ref[h][None, :, :]                          # bias bcast over Bt

        # Numerically-stable softmax, all elementwise work in f32.
        m = jnp.max(s, axis=-1, keepdims=True)
        p = jnp.exp(s - m)
        denom = jnp.sum(p, axis=-1, keepdims=True)
        attn = p * pl.reciprocal(denom, approx=True)             # EUP reciprocal

        o = jnp.einsum('bqk,bkd->bqd', attn.astype(jnp.bfloat16), v3,
                       preferred_element_type=jnp.float32)       # (Bt, N, d)

        # Output projection accumulated per head:
        #   sum_h (attn_h @ v_h) @ Wout[h*d:(h+1)*d, :]  ==  concat(...) @ Wout
        acc = acc + jnp.dot(o.reshape(bt * n, dim_head).astype(jnp.bfloat16),
                            wout_ref[h], preferred_element_type=jnp.float32)

    y = acc + bout_ref[...]                                      # (Bt*N, D) + (1, D)
    y_ref[...] = y.reshape(bt, n, d_model).astype(y_ref.dtype)


def msa_forward(x, wqkv, attn_bias, wout, bout, *, heads, dim_head,
                batch_tile=None):
    B, N, D = x.shape
    inner = heads * dim_head
    scale = dim_head ** -0.5

    # ---- wrapper-side layout plumbing (done once, outside the kernel) ----
    wq, wk, wv = jnp.split(wqkv, 3, axis=-1)                 # each (D, H*d)

    def per_head(w):                                         # (D, H*d) -> (H, D, d)
        return w.reshape(D, heads, dim_head).transpose(1, 0, 2)

    wq_h = (per_head(wq) * scale).astype(jnp.bfloat16)       # fold scale into q
    wk_h = per_head(wk).astype(jnp.bfloat16)
    wv_h = per_head(wv).astype(jnp.bfloat16)
    wout_h = wout.reshape(heads, dim_head, D).astype(jnp.bfloat16)  # (H, d, D)
    x_bf = x.astype(jnp.bfloat16)
    bias_f32 = attn_bias.astype(jnp.float32)
    bout_f32 = bout.astype(jnp.float32)

    # Fuse as many batch items per grid step as reasonable (fills MXU rows);
    # keep it a divisor of B so the grid tiles evenly.
    if batch_tile is None:
        batch_tile = 1
        for t in range(1, B + 1):
            if B % t == 0 and t * N <= 512:
                batch_tile = t

    kernel = functools.partial(msa_kernel, heads=heads, dim_head=dim_head)
    return pl.pallas_call(
        kernel,
        out_shape=jax.ShapeDtypeStruct((B, N, D), x.dtype),
        grid_spec=pltpu.PrefetchScalarGridSpec(
            num_scalar_prefetch=0,
            grid=(B // batch_tile,),
            in_specs=[
                pl.BlockSpec((batch_tile, N, D), lambda b: (b, 0, 0)),      # x (bf16)
                pl.BlockSpec((heads, D, dim_head), lambda b: (0, 0, 0)),    # Wq*scale
                pl.BlockSpec((heads, D, dim_head), lambda b: (0, 0, 0)),    # Wk
                pl.BlockSpec((heads, D, dim_head), lambda b: (0, 0, 0)),    # Wv
                pl.BlockSpec((heads, N, N), lambda b: (0, 0, 0)),           # biases
                pl.BlockSpec((heads, dim_head, D), lambda b: (0, 0, 0)),    # Wout per head
                pl.BlockSpec((1, D), lambda b: (0, 0)),                     # b_out
            ],
            out_specs=pl.BlockSpec((batch_tile, N, D), lambda b: (b, 0, 0)),
        ),
        compiler_params=pltpu.CompilerParams(
            dimension_semantics=("parallel",)),
    )(x_bf, wq_h, wk_h, wv_h, bias_f32, wout_h, bout_f32)
    # TODO(synk): for very large N the (H, N, N) bias + (Bt, N, N) scores should be
    # kv-tiled with an online softmax (v7x 64 MiB VMEM); not needed at these shapes.


def msa_reference(x, wqkv, attn_bias, wout, bout, *, heads, dim_head):
    """Pure-JAX f32 reference mirroring the PyTorch forward."""
    B, N, D = x.shape
    inner = heads * dim_head
    scale = dim_head ** -0.5
    qkv = x @ wqkv                                       # (B, N, 3*inner)
    q, k, v = jnp.split(qkv, 3, axis=-1)

    def split_heads(t):                                  # b n (h d) -> b h n d
        return t.reshape(B, N, heads, dim_head).transpose(0, 2, 1, 3)

    q, k, v = map(split_heads, (q, k, v))
    dots = jnp.einsum('bhid,bhjd->bhij', q, k) * scale
    attn = jax.nn.softmax(dots + attn_bias[None], axis=-1)
    out = jnp.einsum('bhij,bhjd->bhid', attn, v)
    out = out.transpose(0, 2, 1, 3).reshape(B, N, inner)  # b h n d -> b n (h d)
    return out @ wout + bout[0]


if __name__ == "__main__":
    # Small shapes consistent with the module: num_tokens must equal seq len.
    B, N, DIM = 2, 8, 32
    HEADS, DIM_HEAD = 4, 16
    INNER = HEADS * DIM_HEAD

    key = jax.random.PRNGKey(0)
    kx, kq, kb, kw, kbo = jax.random.split(key, 5)

    x = jax.random.normal(kx, (B, N, DIM), dtype=jnp.float32)
    wqkv = jax.random.normal(kq, (DIM, 3 * INNER), dtype=jnp.float32) * 0.05
    # attention_biases initializes to zeros in the module; use small values so
    # the bias path is actually exercised.
    attn_bias = jax.random.normal(kb, (HEADS, N, N), dtype=jnp.float32) * 0.1
    wout = jax.random.normal(kw, (INNER, DIM), dtype=jnp.float32) * 0.05
    bout = jax.random.normal(kbo, (1, DIM), dtype=jnp.float32) * 0.05
    # TODO(synk): nn.Dropout(p=0.0) is identity in eval; no dropout implemented.

    y = msa_forward(x, wqkv, attn_bias, wout, bout,
                    heads=HEADS, dim_head=DIM_HEAD)
    y = jax.block_until_ready(y)

    y_ref = msa_reference(x, wqkv, attn_bias, wout, bout,
                          heads=HEADS, dim_head=DIM_HEAD)
    assert y.shape == (B, N, DIM)
    # bf16 MXU operands + approx reciprocal -> compare with a looser tolerance.
    assert jnp.allclose(y, y_ref, atol=2e-2, rtol=2e-2), "mismatch vs reference"
    print("KERNEL_OK")
</pallas_src>

<mosaic_0001>
module attributes {stable_mosaic.version = 11 : i64} {
  func.func @msa_kernel(%arg0: i32, %arg1: memref<2x8x32xbf16, #tpu.memory_space<vmem>>, %arg2: memref<4x32x16xbf16, #tpu.memory_space<vmem>>, %arg3: memref<4x32x16xbf16, #tpu.memory_space<vmem>>, %arg4: memref<4x32x16xbf16, #tpu.memory_space<vmem>>, %arg5: memref<4x8x8xf32, #tpu.memory_space<vmem>>, %arg6: memref<4x16x32xbf16, #tpu.memory_space<vmem>>, %arg7: memref<1x32xf32, #tpu.memory_space<vmem>>, %arg8: memref<2x8x32xf32, #tpu.memory_space<vmem>>) attributes {dimension_semantics = [#tpu.dimension_semantics<parallel>], iteration_bounds = array<i64: 1>, scalar_prefetch = 0 : i64, scratch_operands = 0 : i64, tpu.core_type = #tpu.core_type<tc>, window_params = [{transform_indices = @transform_0, window_bounds = array<i64: 2, 8, 32>}, {pipeline_mode = #tpu.pipeline_mode<synchronous>, transform_indices = @transform_1, window_bounds = array<i64: 4, 32, 16>}, {pipeline_mode = #tpu.pipeline_mode<synchronous>, transform_indices = @transform_2, window_bounds = array<i64: 4, 32, 16>}, {pipeline_mode = #tpu.pipeline_mode<synchronous>, transform_indices = @transform_3, window_bounds = array<i64: 4, 32, 16>}, {pipeline_mode = #tpu.pipeline_mode<synchronous>, transform_indices = @transform_4, window_bounds = array<i64: 4, 8, 8>}, {pipeline_mode = #tpu.pipeline_mode<synchronous>, transform_indices = @transform_5, window_bounds = array<i64: 4, 16, 32>}, {pipeline_mode = #tpu.pipeline_mode<synchronous>, transform_indices = @transform_6, window_bounds = array<i64: 1, 32>}, {transform_indices = @transform_7, window_bounds = array<i64: 2, 8, 32>}]} {
    %c0 = arith.constant 0 : index
    %c0_0 = arith.constant 0 : index
    %c0_1 = arith.constant 0 : index
    %0 = vector.load %arg1[%c0, %c0_0, %c0_1] : memref<2x8x32xbf16, #tpu.memory_space<vmem>>, vector<2x8x32xbf16>
    %1 = vector.shape_cast %0 : vector<2x8x32xbf16> to vector<16x32xbf16>
    %cst = arith.constant 0.000000e+00 : f32
    %2 = vector.broadcast %cst : f32 to vector<16x32xf32>
    %c0_2 = arith.constant 0 : index
    %c0_3 = arith.constant 0 : index
    %c0_4 = arith.constant 0 : index
    %3 = vector.load %arg2[%c0_2, %c0_3, %c0_4] : memref<4x32x16xbf16, #tpu.memory_space<vmem>>, vector<1x32x16xbf16>
    %4 = vector.shape_cast %3 : vector<1x32x16xbf16> to vector<32x16xbf16>
    %cst_5 = arith.constant dense<0.000000e+00> : vector<16x16xf32>
    %5 = tpu.matmul %1, %4, %cst_5 {dimension_numbers = #tpu.dot_dimension_numbers<[1], [0], [0], [1], [0, 0, 1, 1], [], []>} : vector<16x32xbf16>, vector<32x16xbf16>, vector<16x16xf32> -> vector<16x16xf32>
    %c0_6 = arith.constant 0 : index
    %c0_7 = arith.constant 0 : index
    %c0_8 = arith.constant 0 : index
    %6 = vector.load %arg3[%c0_6, %c0_7, %c0_8] : memref<4x32x16xbf16, #tpu.memory_space<vmem>>, vector<1x32x16xbf16>
    %7 = vector.shape_cast %6 : vector<1x32x16xbf16> to vector<32x16xbf16>
    %cst_9 = arith.constant dense<0.000000e+00> : vector<16x16xf32>
    %8 = tpu.matmul %1, %7, %cst_9 {dimension_numbers = #tpu.dot_dimension_numbers<[1], [0], [0], [1], [0, 0, 1, 1], [], []>} : vector<16x32xbf16>, vector<32x16xbf16>, vector<16x16xf32> -> vector<16x16xf32>
    %c0_10 = arith.constant 0 : index
    %c0_11 = arith.constant 0 : index
    %c0_12 = arith.constant 0 : index
    %9 = vector.load %arg4[%c0_10, %c0_11, %c0_12] : memref<4x32x16xbf16, #tpu.memory_space<vmem>>, vector<1x32x16xbf16>
    %10 = vector.shape_cast %9 : vector<1x32x16xbf16> to vector<32x16xbf16>
    %cst_13 = arith.constant dense<0.000000e+00> : vector<16x16xf32>
    %11 = tpu.matmul %1, %10, %cst_13 {dimension_numbers = #tpu.dot_dimension_numbers<[1], [0], [0], [1], [0, 0, 1, 1], [], []>} : vector<16x32xbf16>, vector<32x16xbf16>, vector<16x16xf32> -> vector<16x16xf32>
    %12 = vector.shape_cast %5 : vector<16x16xf32> to vector<2x8x16xf32>
    %13 = arith.truncf %12 : vector<2x8x16xf32> to vector<2x8x16xbf16>
    %14 = vector.shape_cast %8 : vector<16x16xf32> to vector<2x8x16xf32>
    %15 = arith.truncf %14 : vector<2x8x16xf32> to vector<2x8x16xbf16>
    %16 = vector.shape_cast %11 : vector<16x16xf32> to vector<2x8x16xf32>
    %17 = arith.truncf %16 : vector<2x8x16xf32> to vector<2x8x16xbf16>
    "tpu.trace_start"() <{level = 10 : i32, message = "bqd,bkd->bqk"}> : () -> ()
    %cst_14 = arith.constant dense<0.000000e+00> : vector<2x8x8xf32>
    %18 = tpu.matmul %13, %15, %cst_14 {dimension_numbers = #tpu.dot_dimension_numbers<[2], [2], [1], [1], [0, 0, 0, 1, 1, 1], [0], [0]>} : vector<2x8x16xbf16>, vector<2x8x16xbf16>, vector<2x8x8xf32> -> vector<2x8x8xf32>
    "tpu.trace_stop"() : () -> ()
    %c0_15 = arith.constant 0 : index
    %c0_16 = arith.constant 0 : index
    %c0_17 = arith.constant 0 : index
    %19 = vector.load %arg5[%c0_15, %c0_16, %c0_17] : memref<4x8x8xf32, #tpu.memory_space<vmem>>, vector<1x8x8xf32>
    %20 = vector.shape_cast %19 : vector<1x8x8xf32> to vector<8x8xf32>
    %21 = vector.shape_cast %20 : vector<8x8xf32> to vector<1x8x8xf32>
    %22 = vector.broadcast %21 : vector<1x8x8xf32> to vector<2x8x8xf32>
    %23 = arith.addf %18, %22 : vector<2x8x8xf32>
    %cst_18 = arith.constant dense<0xFF800000> : vector<2x8xf32>
    %24 = vector.multi_reduction <maximumf>, %23, %cst_18 [2] : vector<2x8x8xf32> to vector<2x8xf32>
    %25 = vector.shape_cast %24 : vector<2x8xf32> to vector<2x8x1xf32>
    %26 = vector.broadcast %25 : vector<2x8x1xf32> to vector<2x8x8xf32>
    %27 = arith.subf %23, %26 : vector<2x8x8xf32>
    %28 = math.exp %27 : vector<2x8x8xf32>
    %cst_19 = arith.constant dense<0.000000e+00> : vector<2x8xf32>
    %29 = vector.multi_reduction <add>, %28, %cst_19 [2] : vector<2x8x8xf32> to vector<2x8xf32>
    %30 = vector.shape_cast %29 : vector<2x8xf32> to vector<2x8x1xf32>
    %31 = tpu.reciprocal %30 {approx = true} : vector<2x8x1xf32> -> vector<2x8x1xf32>
    %32 = vector.broadcast %31 : vector<2x8x1xf32> to vector<2x8x8xf32>
    %33 = arith.mulf %28, %32 : vector<2x8x8xf32>
    %34 = arith.truncf %33 : vector<2x8x8xf32> to vector<2x8x8xbf16>
    "tpu.trace_start"() <{level = 10 : i32, message = "bqk,bkd->bqd"}> : () -> ()
    %cst_20 = arith.constant dense<0.000000e+00> : vector<2x8x16xf32>
    %35 = tpu.matmul %34, %17, %cst_20 {dimension_numbers = #tpu.dot_dimension_numbers<[2], [1], [1], [2], [0, 0, 0, 1, 1, 2], [0], [0]>} : vector<2x8x8xbf16>, vector<2x8x16xbf16>, vector<2x8x16xf32> -> vector<2x8x16xf32>
    "tpu.trace_stop"() : () -> ()
    %36 = vector.shape_cast %35 : vector<2x8x16xf32> to vector<16x16xf32>
    %37 = arith.truncf %36 : vector<16x16xf32> to vector<16x16xbf16>
    %c0_21 = arith.constant 0 : index
    %c0_22 = arith.constant 0 : index
    %c0_23 = arith.constant 0 : index
    %38 = vector.load %arg6[%c0_21, %c0_22, %c0_23] : memref<4x16x32xbf16, #tpu.memory_space<vmem>>, vector<1x16x32xbf16>
    %39 = vector.shape_cast %38 : vector<1x16x32xbf16> to vector<16x32xbf16>
    %cst_24 = arith.constant dense<0.000000e+00> : vector<16x32xf32>
    %40 = tpu.matmul %37, %39, %cst_24 {dimension_numbers = #tpu.dot_dimension_numbers<[1], [0], [0], [1], [0, 0, 1, 1], [], []>} : vector<16x16xbf16>, vector<16x32xbf16>, vector<16x32xf32> -> vector<16x32xf32>
    %41 = arith.addf %2, %40 : vector<16x32xf32>
    %c1 = arith.constant 1 : index
    %c0_25 = arith.constant 0 : index
    %c0_26 = arith.constant 0 : index
    %42 = vector.load %arg2[%c1, %c0_25, %c0_26] : memref<4x32x16xbf16, #tpu.memory_space<vmem>>, vector<1x32x16xbf16>
    %43 = vector.shape_cast %42 : vector<1x32x16xbf16> to vector<32x16xbf16>
    %cst_27 = arith.constant dense<0.000000e+00> : vector<16x16xf32>
    %44 = tpu.matmul %1, %43, %cst_27 {dimension_numbers = #tpu.dot_dimension_numbers<[1], [0], [0], [1], [0, 0, 1, 1], [], []>} : vector<16x32xbf16>, vector<32x16xbf16>, vector<16x16xf32> -> vector<16x16xf32>
    %c1_28 = arith.constant 1 : index
    %c0_29 = arith.constant 0 : index
    %c0_30 = arith.constant 0 : index
    %45 = vector.load %arg3[%c1_28, %c0_29, %c0_30] : memref<4x32x16xbf16, #tpu.memory_space<vmem>>, vector<1x32x16xbf16>
    %46 = vector.shape_cast %45 : vector<1x32x16xbf16> to vector<32x16xbf16>
    %cst_31 = arith.constant dense<0.000000e+00> : vector<16x16xf32>
    %47 = tpu.matmul %1, %46, %cst_31 {dimension_numbers = #tpu.dot_dimension_numbers<[1], [0], [0], [1], [0, 0, 1, 1], [], []>} : vector<16x32xbf16>, vector<32x16xbf16>, vector<16x16xf32> -> vector<16x16xf32>
    %c1_32 = arith.constant 1 : index
    %c0_33 = arith.constant 0 : index
    %c0_34 = arith.constant 0 : index
    %48 = vector.load %arg4[%c1_32, %c0_33, %c0_34] : memref<4x32x16xbf16, #tpu.memory_space<vmem>>, vector<1x32x16xbf16>
    %49 = vector.shape_cast %48 : vector<1x32x16xbf16> to vector<32x16xbf16>
    %cst_35 = arith.constant dense<0.000000e+00> : vector<16x16xf32>
    %50 = tpu.matmul %1, %49, %cst_35 {dimension_numbers = #tpu.dot_dimension_numbers<[1], [0], [0], [1], [0, 0, 1, 1], [], []>} : vector<16x32xbf16>, vector<32x16xbf16>, vector<16x16xf32> -> vector<16x16xf32>
    %51 = vector.shape_cast %44 : vector<16x16xf32> to vector<2x8x16xf32>
    %52 = arith.truncf %51 : vector<2x8x16xf32> to vector<2x8x16xbf16>
    %53 = vector.shape_cast %47 : vector<16x16xf32> to vector<2x8x16xf32>
    %54 = arith.truncf %53 : vector<2x8x16xf32> to vector<2x8x16xbf16>
    %55 = vector.shape_cast %50 : vector<16x16xf32> to vector<2x8x16xf32>
    %56 = arith.truncf %55 : vector<2x8x16xf32> to vector<2x8x16xbf16>
    "tpu.trace_start"() <{level = 10 : i32, message = "bqd,bkd->bqk"}> : () -> ()
    %cst_36 = arith.constant dense<0.000000e+00> : vector<2x8x8xf32>
    %57 = tpu.matmul %52, %54, %cst_36 {dimension_numbers = #tpu.dot_dimension_numbers<[2], [2], [1], [1], [0, 0, 0, 1, 1, 1], [0], [0]>} : vector<2x8x16xbf16>, vector<2x8x16xbf16>, vector<2x8x8xf32> -> vector<2x8x8xf32>
    "tpu.trace_stop"() : () -> ()
    %c1_37 = arith.constant 1 : index
    %c0_38 = arith.constant 0 : index
    %c0_39 = arith.constant 0 : index
    %58 = vector.load %arg5[%c1_37, %c0_38, %c0_39] : memref<4x8x8xf32, #tpu.memory_space<vmem>>, vector<1x8x8xf32>
    %59 = vector.shape_cast %58 : vector<1x8x8xf32> to vector<8x8xf32>
    %60 = vector.shape_cast %59 : vector<8x8xf32> to vector<1x8x8xf32>
    %61 = vector.broadcast %60 : vector<1x8x8xf32> to vector<2x8x8xf32>
    %62 = arith.addf %57, %61 : vector<2x8x8xf32>
    %cst_40 = arith.constant dense<0xFF800000> : vector<2x8xf32>
    %63 = vector.multi_reduction <maximumf>, %62, %cst_40 [2] : vector<2x8x8xf32> to vector<2x8xf32>
    %64 = vector.shape_cast %63 : vector<2x8xf32> to vector<2x8x1xf32>
    %65 = vector.broadcast %64 : vector<2x8x1xf32> to vector<2x8x8xf32>
    %66 = arith.subf %62, %65 : vector<2x8x8xf32>
    %67 = math.exp %66 : vector<2x8x8xf32>
    %cst_41 = arith.constant dense<0.000000e+00> : vector<2x8xf32>
    %68 = vector.multi_reduction <add>, %67, %cst_41 [2] : vector<2x8x8xf32> to vector<2x8xf32>
    %69 = vector.shape_cast %68 : vector<2x8xf32> to vector<2x8x1xf32>
    %70 = tpu.reciprocal %69 {approx = true} : vector<2x8x1xf32> -> vector<2x8x1xf32>
    %71 = vector.broadcast %70 : vector<2x8x1xf32> to vector<2x8x8xf32>
    %72 = arith.mulf %67, %71 : vector<2x8x8xf32>
    %73 = arith.truncf %72 : vector<2x8x8xf32> to vector<2x8x8xbf16>
    "tpu.trace_start"() <{level = 10 : i32, message = "bqk,bkd->bqd"}> : () -> ()
    %cst_42 = arith.constant dense<0.000000e+00> : vector<2x8x16xf32>
    %74 = tpu.matmul %73, %56, %cst_42 {dimension_numbers = #tpu.dot_dimension_numbers<[2], [1], [1], [2], [0, 0, 0, 1, 1, 2], [0], [0]>} : vector<2x8x8xbf16>, vector<2x8x16xbf16>, vector<2x8x16xf32> -> vector<2x8x16xf32>
    "tpu.trace_stop"() : () -> ()
    %75 = vector.shape_cast %74 : vector<2x8x16xf32> to vector<16x16xf32>
    %76 = arith.truncf %75 : vector<16x16xf32> to vector<16x16xbf16>
    %c1_43 = arith.constant 1 : index
    %c0_44 = arith.constant 0 : index
    %c0_45 = arith.constant 0 : index
    %77 = vector.load %arg6[%c1_43, %c0_44, %c0_45] : memref<4x16x32xbf16, #tpu.memory_space<vmem>>, vector<1x16x32xbf16>
    %78 = vector.shape_cast %77 : vector<1x16x32xbf16> to vector<16x32xbf16>
    %cst_46 = arith.constant dense<0.000000e+00> : vector<16x32xf32>
    %79 = tpu.matmul %76, %78, %cst_46 {dimension_numbers = #tpu.dot_dimension_numbers<[1], [0], [0], [1], [0, 0, 1, 1], [], []>} : vector<16x16xbf16>, vector<16x32xbf16>, vector<16x32xf32> -> vector<16x32xf32>
    %80 = arith.addf %41, %79 : vector<16x32xf32>
    %c2 = arith.constant 2 : index
    %c0_47 = arith.constant 0 : index
    %c0_48 = arith.constant 0 : index
    %81 = vector.load %arg2[%c2, %c0_47, %c0_48] : memref<4x32x16xbf16, #tpu.memory_space<vmem>>, vector<1x32x16xbf16>
    %82 = vector.shape_cast %81 : vector<1x32x16xbf16> to vector<32x16xbf16>
    %cst_49 = arith.constant dense<0.000000e+00> : vector<16x16xf32>
    %83 = tpu.matmul %1, %82, %cst_49 {dimension_numbers = #tpu.dot_dimension_numbers<[1], [0], [0], [1], [0, 0, 1, 1], [], []>} : vector<16x32xbf16>, vector<32x16xbf16>, vector<16x16xf32> -> vector<16x16xf32>
    %c2_50 = arith.constant 2 : index
    %c0_51 = arith.constant 0 : index
    %c0_52 = arith.constant 0 : index
    %84 = vector.load %arg3[%c2_50, %c0_51, %c0_52] : memref<4x32x16xbf16, #tpu.memory_space<vmem>>, vector<1x32x16xbf16>
    %85 = vector.shape_cast %84 : vector<1x32x16xbf16> to vector<32x16xbf16>
    %cst_53 = arith.constant dense<0.000000e+00> : vector<16x16xf32>
    %86 = tpu.matmul %1, %85, %cst_53 {dimension_numbers = #tpu.dot_dimension_numbers<[1], [0], [0], [1], [0, 0, 1, 1], [], []>} : vector<16x32xbf16>, vector<32x16xbf16>, vector<16x16xf32> -> vector<16x16xf32>
    %c2_54 = arith.constant 2 : index
    %c0_55 = arith.constant 0 : index
    %c0_56 = arith.constant 0 : index
    %87 = vector.load %arg4[%c2_54, %c0_55, %c0_56] : memref<4x32x16xbf16, #tpu.memory_space<vmem>>, vector<1x32x16xbf16>
    %88 = vector.shape_cast %87 : vector<1x32x16xbf16> to vector<32x16xbf16>
    %cst_57 = arith.constant dense<0.000000e+00> : vector<16x16xf32>
    %89 = tpu.matmul %1, %88, %cst_57 {dimension_numbers = #tpu.dot_dimension_numbers<[1], [0], [0], [1], [0, 0, 1, 1], [], []>} : vector<16x32xbf16>, vector<32x16xbf16>, vector<16x16xf32> -> vector<16x16xf32>
    %90 = vector.shape_cast %83 : vector<16x16xf32> to vector<2x8x16xf32>
    %91 = arith.truncf %90 : vector<2x8x16xf32> to vector<2x8x16xbf16>
    %92 = vector.shape_cast %86 : vector<16x16xf32> to vector<2x8x16xf32>
    %93 = arith.truncf %92 : vector<2x8x16xf32> to vector<2x8x16xbf16>
    %94 = vector.shape_cast %89 : vector<16x16xf32> to vector<2x8x16xf32>
    %95 = arith.truncf %94 : vector<2x8x16xf32> to vector<2x8x16xbf16>
    "tpu.trace_start"() <{level = 10 : i32, message = "bqd,bkd->bqk"}> : () -> ()
    %cst_58 = arith.constant dense<0.000000e+00> : vector<2x8x8xf32>
    %96 = tpu.matmul %91, %93, %cst_58 {dimension_numbers = #tpu.dot_dimension_numbers<[2], [2], [1], [1], [0, 0, 0, 1, 1, 1], [0], [0]>} : vector<2x8x16xbf16>, vector<2x8x16xbf16>, vector<2x8x8xf32> -> vector<2x8x8xf32>
    "tpu.trace_stop"() : () -> ()
    %c2_59 = arith.constant 2 : index
    %c0_60 = arith.constant 0 : index
    %c0_61 = arith.constant 0 : index
    %97 = vector.load %arg5[%c2_59, %c0_60, %c0_61] : memref<4x8x8xf32, #tpu.memory_space<vmem>>, vector<1x8x8xf32>
    %98 = vector.shape_cast %97 : vector<1x8x8xf32> to vector<8x8xf32>
    %99 = vector.shape_cast %98 : vector<8x8xf32> to vector<1x8x8xf32>
    %100 = vector.broadcast %99 : vector<1x8x8xf32> to vector<2x8x8xf32>
    %101 = arith.addf %96, %100 : vector<2x8x8xf32>
    %cst_62 = arith.constant dense<0xFF800000> : vector<2x8xf32>
    %102 = vector.multi_reduction <maximumf>, %101, %cst_62 [2] : vector<2x8x8xf32> to vector<2x8xf32>
    %103 = vector.shape_cast %102 : vector<2x8xf32> to vector<2x8x1xf32>
    %104 = vector.broadcast %103 : vector<2x8x1xf32> to vector<2x8x8xf32>
    %105 = arith.subf %101, %104 : vector<2x8x8xf32>
    %106 = math.exp %105 : vector<2x8x8xf32>
    %cst_63 = arith.constant dense<0.000000e+00> : vector<2x8xf32>
    %107 = vector.multi_reduction <add>, %106, %cst_63 [2] : vector<2x8x8xf32> to vector<2x8xf32>
    %108 = vector.shape_cast %107 : vector<2x8xf32> to vector<2x8x1xf32>
    %109 = tpu.reciprocal %108 {approx = true} : vector<2x8x1xf32> -> vector<2x8x1xf32>
    %110 = vector.broadcast %109 : vector<2x8x1xf32> to vector<2x8x8xf32>
    %111 = arith.mulf %106, %110 : vector<2x8x8xf32>
    %112 = arith.truncf %111 : vector<2x8x8xf32> to vector<2x8x8xbf16>
    "tpu.trace_start"() <{level = 10 : i32, message = "bqk,bkd->bqd"}> : () -> ()
    %cst_64 = arith.constant dense<0.000000e+00> : vector<2x8x16xf32>
    %113 = tpu.matmul %112, %95, %cst_64 {dimension_numbers = #tpu.dot_dimension_numbers<[2], [1], [1], [2], [0, 0, 0, 1, 1, 2], [0], [0]>} : vector<2x8x8xbf16>, vector<2x8x16xbf16>, vector<2x8x16xf32> -> vector<2x8x16xf32>
    "tpu.trace_stop"() : () -> ()
    %114 = vector.shape_cast %113 : vector<2x8x16xf32> to vector<16x16xf32>
    %115 = arith.truncf %114 : vector<16x16xf32> to vector<16x16xbf16>
    %c2_65 = arith.constant 2 : index
    %c0_66 = arith.constant 0 : index
    %c0_67 = arith.constant 0 : index
    %116 = vector.load %arg6[%c2_65, %c0_66, %c0_67] : memref<4x16x32xbf16, #tpu.memory_space<vmem>>, vector<1x16x32xbf16>
    %117 = vector.shape_cast %116 : vector<1x16x32xbf16> to vector<16x32xbf16>
    %cst_68 = arith.constant dense<0.000000e+00> : vector<16x32xf32>
    %118 = tpu.matmul %115, %117, %cst_68 {dimension_numbers = #tpu.dot_dimension_numbers<[1], [0], [0], [1], [0, 0, 1, 1], [], []>} : vector<16x16xbf16>, vector<16x32xbf16>, vector<16x32xf32> -> vector<16x32xf32>
    %119 = arith.addf %80, %118 : vector<16x32xf32>
    %c3 = arith.constant 3 : index
    %c0_69 = arith.constant 0 : index
    %c0_70 = arith.constant 0 : index
    %120 = vector.load %arg2[%c3, %c0_69, %c0_70] : memref<4x32x16xbf16, #tpu.memory_space<vmem>>, vector<1x32x16xbf16>
    %121 = vector.shape_cast %120 : vector<1x32x16xbf16> to vector<32x16xbf16>
    %cst_71 = arith.constant dense<0.000000e+00> : vector<16x16xf32>
    %122 = tpu.matmul %1, %121, %cst_71 {dimension_numbers = #tpu.dot_dimension_numbers<[1], [0], [0], [1], [0, 0, 1, 1], [], []>} : vector<16x32xbf16>, vector<32x16xbf16>, vector<16x16xf32> -> vector<16x16xf32>
    %c3_72 = arith.constant 3 : index
    %c0_73 = arith.constant 0 : index
    %c0_74 = arith.constant 0 : index
    %123 = vector.load %arg3[%c3_72, %c0_73, %c0_74] : memref<4x32x16xbf16, #tpu.memory_space<vmem>>, vector<1x32x16xbf16>
    %124 = vector.shape_cast %123 : vector<1x32x16xbf16> to vector<32x16xbf16>
    %cst_75 = arith.constant dense<0.000000e+00> : vector<16x16xf32>
    %125 = tpu.matmul %1, %124, %cst_75 {dimension_numbers = #tpu.dot_dimension_numbers<[1], [0], [0], [1], [0, 0, 1, 1], [], []>} : vector<16x32xbf16>, vector<32x16xbf16>, vector<16x16xf32> -> vector<16x16xf32>
    %c3_76 = arith.constant 3 : index
    %c0_77 = arith.constant 0 : index
    %c0_78 = arith.constant 0 : index
    %126 = vector.load %arg4[%c3_76, %c0_77, %c0_78] : memref<4x32x16xbf16, #tpu.memory_space<vmem>>, vector<1x32x16xbf16>
    %127 = vector.shape_cast %126 : vector<1x32x16xbf16> to vector<32x16xbf16>
    %cst_79 = arith.constant dense<0.000000e+00> : vector<16x16xf32>
    %128 = tpu.matmul %1, %127, %cst_79 {dimension_numbers = #tpu.dot_dimension_numbers<[1], [0], [0], [1], [0, 0, 1, 1], [], []>} : vector<16x32xbf16>, vector<32x16xbf16>, vector<16x16xf32> -> vector<16x16xf32>
    %129 = vector.shape_cast %122 : vector<16x16xf32> to vector<2x8x16xf32>
    %130 = arith.truncf %129 : vector<2x8x16xf32> to vector<2x8x16xbf16>
    %131 = vector.shape_cast %125 : vector<16x16xf32> to vector<2x8x16xf32>
    %132 = arith.truncf %131 : vector<2x8x16xf32> to vector<2x8x16xbf16>
    %133 = vector.shape_cast %128 : vector<16x16xf32> to vector<2x8x16xf32>
    %134 = arith.truncf %133 : vector<2x8x16xf32> to vector<2x8x16xbf16>
    "tpu.trace_start"() <{level = 10 : i32, message = "bqd,bkd->bqk"}> : () -> ()
    %cst_80 = arith.constant dense<0.000000e+00> : vector<2x8x8xf32>
    %135 = tpu.matmul %130, %132, %cst_80 {dimension_numbers = #tpu.dot_dimension_numbers<[2], [2], [1], [1], [0, 0, 0, 1, 1, 1], [0], [0]>} : vector<2x8x16xbf16>, vector<2x8x16xbf16>, vector<2x8x8xf32> -> vector<2x8x8xf32>
    "tpu.trace_stop"() : () -> ()
    %c3_81 = arith.constant 3 : index
    %c0_82 = arith.constant 0 : index
    %c0_83 = arith.constant 0 : index
    %136 = vector.load %arg5[%c3_81, %c0_82, %c0_83] : memref<4x8x8xf32, #tpu.memory_space<vmem>>, vector<1x8x8xf32>
    %137 = vector.shape_cast %136 : vector<1x8x8xf32> to vector<8x8xf32>
    %138 = vector.shape_cast %137 : vector<8x8xf32> to vector<1x8x8xf32>
    %139 = vector.broadcast %138 : vector<1x8x8xf32> to vector<2x8x8xf32>
    %140 = arith.addf %135, %139 : vector<2x8x8xf32>
    %cst_84 = arith.constant dense<0xFF800000> : vector<2x8xf32>
    %141 = vector.multi_reduction <maximumf>, %140, %cst_84 [2] : vector<2x8x8xf32> to vector<2x8xf32>
    %142 = vector.shape_cast %141 : vector<2x8xf32> to vector<2x8x1xf32>
    %143 = vector.broadcast %142 : vector<2x8x1xf32> to vector<2x8x8xf32>
    %144 = arith.subf %140, %143 : vector<2x8x8xf32>
    %145 = math.exp %144 : vector<2x8x8xf32>
    %cst_85 = arith.constant dense<0.000000e+00> : vector<2x8xf32>
    %146 = vector.multi_reduction <add>, %145, %cst_85 [2] : vector<2x8x8xf32> to vector<2x8xf32>
    %147 = vector.shape_cast %146 : vector<2x8xf32> to vector<2x8x1xf32>
    %148 = tpu.reciprocal %147 {approx = true} : vector<2x8x1xf32> -> vector<2x8x1xf32>
    %149 = vector.broadcast %148 : vector<2x8x1xf32> to vector<2x8x8xf32>
    %150 = arith.mulf %145, %149 : vector<2x8x8xf32>
    %151 = arith.truncf %150 : vector<2x8x8xf32> to vector<2x8x8xbf16>
    "tpu.trace_start"() <{level = 10 : i32, message = "bqk,bkd->bqd"}> : () -> ()
    %cst_86 = arith.constant dense<0.000000e+00> : vector<2x8x16xf32>
    %152 = tpu.matmul %151, %134, %cst_86 {dimension_numbers = #tpu.dot_dimension_numbers<[2], [1], [1], [2], [0, 0, 0, 1, 1, 2], [0], [0]>} : vector<2x8x8xbf16>, vector<2x8x16xbf16>, vector<2x8x16xf32> -> vector<2x8x16xf32>
    "tpu.trace_stop"() : () -> ()
    %153 = vector.shape_cast %152 : vector<2x8x16xf32> to vector<16x16xf32>
    %154 = arith.truncf %153 : vector<16x16xf32> to vector<16x16xbf16>
    %c3_87 = arith.constant 3 : index
    %c0_88 = arith.constant 0 : index
    %c0_89 = arith.constant 0 : index
    %155 = vector.load %arg6[%c3_87, %c0_88, %c0_89] : memref<4x16x32xbf16, #tpu.memory_space<vmem>>, vector<1x16x32xbf16>
    %156 = vector.shape_cast %155 : vector<1x16x32xbf16> to vector<16x32xbf16>
    %cst_90 = arith.constant dense<0.000000e+00> : vector<16x32xf32>
    %157 = tpu.matmul %154, %156, %cst_90 {dimension_numbers = #tpu.dot_dimension_numbers<[1], [0], [0], [1], [0, 0, 1, 1], [], []>} : vector<16x16xbf16>, vector<16x32xbf16>, vector<16x32xf32> -> vector<16x32xf32>
    %158 = arith.addf %119, %157 : vector<16x32xf32>
    %c0_91 = arith.constant 0 : index
    %c0_92 = arith.constant 0 : index
    %159 = vector.load %arg7[%c0_91, %c0_92] : memref<1x32xf32, #tpu.memory_space<vmem>>, vector<1x32xf32>
    %160 = vector.broadcast %159 : vector<1x32xf32> to vector<16x32xf32>
    %161 = arith.addf %158, %160 : vector<16x32xf32>
    %162 = vector.shape_cast %161 : vector<16x32xf32> to vector<2x8x32xf32>
    %c0_93 = arith.constant 0 : index
    %c0_94 = arith.constant 0 : index
    %c0_95 = arith.constant 0 : index
    %163 = vector.load %arg8[%c0_93, %c0_94, %c0_95] : memref<2x8x32xf32, #tpu.memory_space<vmem>>, vector<2x8x32xf32>
    tpu.vector_store %arg8[%c0_93, %c0_94, %c0_95], %162 {strides = array<i32>} : memref<2x8x32xf32, #tpu.memory_space<vmem>>, vector<2x8x32xf32>,
    return
  }
  func.func @transform_0(%arg0: i32) -> (i32, i32, i32) {
    %c0_i32 = arith.constant 0 : i32
    %c0_i32_0 = arith.constant 0 : i32
    %c0_i32_1 = arith.constant 0 : i32
    return %arg0, %c0_i32, %c0_i32_0 : i32, i32, i32
  }
  func.func @transform_1(%arg0: i32) -> (i32, i32, i32) {
    %c0_i32 = arith.constant 0 : i32
    %c0_i32_0 = arith.constant 0 : i32
    %c0_i32_1 = arith.constant 0 : i32
    %c0_i32_2 = arith.constant 0 : i32
    return %c0_i32, %c0_i32_0, %c0_i32_1 : i32, i32, i32
  }
  func.func @transform_2(%arg0: i32) -> (i32, i32, i32) {
    %c0_i32 = arith.constant 0 : i32
    %c0_i32_0 = arith.constant 0 : i32
    %c0_i32_1 = arith.constant 0 : i32
    %c0_i32_2 = arith.constant 0 : i32
    return %c0_i32, %c0_i32_0, %c0_i32_1 : i32, i32, i32
  }
  func.func @transform_3(%arg0: i32) -> (i32, i32, i32) {
    %c0_i32 = arith.constant 0 : i32
    %c0_i32_0 = arith.constant 0 : i32
    %c0_i32_1 = arith.constant 0 : i32
    %c0_i32_2 = arith.constant 0 : i32
    return %c0_i32, %c0_i32_0, %c0_i32_1 : i32, i32, i32
  }
  func.func @transform_4(%arg0: i32) -> (i32, i32, i32) {
    %c0_i32 = arith.constant 0 : i32
    %c0_i32_0 = arith.constant 0 : i32
    %c0_i32_1 = arith.constant 0 : i32
    %c0_i32_2 = arith.constant 0 : i32
    return %c0_i32, %c0_i32_0, %c0_i32_1 : i32, i32, i32
  }
  func.func @transform_5(%arg0: i32) -> (i32, i32, i32) {
    %c0_i32 = arith.constant 0 : i32
    %c0_i32_0 = arith.constant 0 : i32
    %c0_i32_1 = arith.constant 0 : i32
    %c0_i32_2 = arith.constant 0 : i32
    return %c0_i32, %c0_i32_0, %c0_i32_1 : i32, i32, i32
  }
  func.func @transform_6(%arg0: i32) -> (i32, i32) {
    %c0_i32 = arith.constant 0 : i32
    %c0_i32_0 = arith.constant 0 : i32
    %c0_i32_1 = arith.constant 0 : i32
    return %c0_i32, %c0_i32_0 : i32, i32
  }
  func.func @transform_7(%arg0: i32) -> (i32, i32, i32) {
    %c0_i32 = arith.constant 0 : i32
    %c0_i32_0 = arith.constant 0 : i32
    %c0_i32_1 = arith.constant 0 : i32
    return %arg0, %c0_i32, %c0_i32_0 : i32, i32, i32
  }
}

</mosaic_0001>

<llo_original>
// kernel: tpu_custom_call.1
$region0: #{tpu_custom_call.1}
  #allocation0 [shape = 'u32[]', space=smem, size = 0x4, offset = 0x4, fixed_abs, tag = 'smem constant byte address 0x4 - core index']
  #allocation1 [shape = 'u32[144,128]{1,0:T(1,128)}', space=vmem, size = 0x12000, scoped, tag = 'internal scratch']
  %s0 = inlined_call_operand.vmem [shape: bf16[2,8,32], index: 0, kind: input, shape index: {}]
  %s1 = inlined_call_operand.vmem [shape: bf16[4,32,16], index: 1, kind: input, shape index: {}]
  %s2 = inlined_call_operand.vmem [shape: bf16[4,32,16], index: 2, kind: input, shape index: {}]
  %s3 = inlined_call_operand.vmem [shape: bf16[4,32,16], index: 3, kind: input, shape index: {}]
  %s4 = inlined_call_operand.vmem [shape: f32[4,8,8], index: 4, kind: input, shape index: {}]
  %s5 = inlined_call_operand.vmem [shape: bf16[4,16,32], index: 5, kind: input, shape index: {}]
  %s6 = inlined_call_operand.vmem [shape: f32[1,32], index: 6, kind: input, shape index: {}]
  %s7 = inlined_call_operand.hbm [shape: f32[2,8,32], index: 7, kind: output, shape index: {}]
  %s8 = sld [smem:[#allocation0]]
  $region38: #{tpu_custom_call.1} parent=0
    _
  %s10 = ssub.s32 1, %s8
  %s11 = scalar_select 0, %s10, %s8
  $region1: #{tpu_custom_call.1} parent=0
    #allocation2 [shape = 'u8[8192]{0}', space=vmem, size = 0x2000, scoped, tag = 'output window, operand 0, single buffered']
    #allocation3 [shape = 's32[1]{0}', space=sflag, size = 0x4, scoped, tag = 'scoped memory for tpu_custom_call.1']
    %12 = vsyncpa [#allocation3], 0
    // Predicated region
    $region2: #{tpu_custom_call.1} parent=1 // pred_check
      _
    $region3: #{tpu_custom_call.1} parent=1 // pred_check_branch
      %14 = sbr.rel (0) target = $region5
    $region4: #{tpu_custom_call.1} parent=1 // pred_region
      _
    $region5: #{tpu_custom_call.1} parent=1 // pred_fallthru
      _
    // Predicated region
    $region6: #{tpu_custom_call.1} parent=1 // pred_check
      _
    $region7: #{tpu_custom_call.1} parent=1 // pred_check_branch
      %16 = sbr.rel (0) target = $region9
    $region8: #{tpu_custom_call.1} parent=1 // pred_region
      _
    $region9: #{tpu_custom_call.1} parent=1 // pred_fallthru
      _
    // Predicated region
    $region10: #{tpu_custom_call.1} parent=1 // pred_check
      _
    $region11: #{tpu_custom_call.1} parent=1 // pred_check_branch
      %18 = sbr.rel (0) target = $region13
    $region12: #{tpu_custom_call.1} parent=1 // pred_region
      _
    $region13: #{tpu_custom_call.1} parent=1 // pred_fallthru
      _
    // Predicated region
    $region14: #{tpu_custom_call.1} parent=1 // pred_check
      _
    $region15: #{tpu_custom_call.1} parent=1 // pred_check_branch
      %20 = sbr.rel (0) target = $region17
    $region16: #{tpu_custom_call.1} parent=1 // pred_region
      _
    $region17: #{tpu_custom_call.1} parent=1 // pred_fallthru
      _
    // Predicated region
    $region18: #{tpu_custom_call.1} parent=1 // pred_check
      _
    $region19: #{tpu_custom_call.1} parent=1 // pred_check_branch
      %22 = sbr.rel (0) target = $region21
    $region20: #{tpu_custom_call.1} parent=1 // pred_region
      _
    $region21: #{tpu_custom_call.1} parent=1 // pred_fallthru
      _
    // Predicated region
    $region22: #{tpu_custom_call.1} parent=1 // pred_check
      _
    $region23: #{tpu_custom_call.1} parent=1 // pred_check_branch
      %24 = sbr.rel (0) target = $region25
    $region24: #{tpu_custom_call.1} parent=1 // pred_region
      _
    $region25: #{tpu_custom_call.1} parent=1 // pred_fallthru
      _
    // Predicated region
    $region26: #{tpu_custom_call.1} parent=1 // pred_check
      _
    $region27: #{tpu_custom_call.1} parent=1 // pred_check_branch
      %26 = sbr.rel (0) target = $region29
    $region28: #{tpu_custom_call.1} parent=1 // pred_region
      _
    $region29: #{tpu_custom_call.1} parent=1 // pred_fallthru
      _
    %v28 = vld [vmem:[%s0] sm:$0xf]
    %v29 = vld [vmem:[%s0 + $0x4] sm:$0xf]
    %v30 = vld [vmem:[%s1] sm:$0xf]
    %v31 = vld [vmem:[%s1 + $0x4] sm:$0xf]
    %v32 = vld [vmem:[%s1 + $0x8] sm:$0xf]
    %v33 = vld [vmem:[%s1 + $0xc] sm:$0xf]
    %v36 = vunpack.c.l.b16 %v28
    %v37 = vunpack.c.l.b16 %v29
    %v38 = vpack.c.b16 %v37, %v36
    %v43 = vunpack.c.l.b16 %v30
    %v44 = vunpack.c.l.b16 %v31
    %v45 = vunpack.c.l.b16 %v32
    %v46 = vunpack.c.l.b16 %v33
    %v47 = vpack.c.b16 %v44, %v43
    %v48 = vpack.c.b16 %v46, %v45
    %vm51 = vcmask 261120
    %v53 = vsel %vm51, %v38, 0
    %55 = vmatprep.subr.bf16.mxu0 0
    %56 = vmatpush1.bf16.msra.mxu0 0
    %57 = vmatprep.subr.bf16.mxu0 0
    %58 = vmatpush1.bf16.msra.mxu0 0
    %59 = vmatprep.subr.bf16.mxu0 0
    %60 = vmatpush1.bf16.msra.mxu0 0
    %61 = vmatprep.subr.bf16.mxu0 0
    %62 = vmatpush1.bf16.msra.mxu0 0
    %63 = vmatprep.subr.bf16.mxu0 0
    %64 = vmatpush1.bf16.msra.mxu0 0
    %65 = vmatprep.subr.bf16.mxu0 0
    %66 = vmatpush1.bf16.msra.mxu0 0
    %67 = vmatprep.subr.bf16.mxu0 0
    %68 = vmatpush1.bf16.msra.mxu0 %v48
    %69 = vmatprep.subr.bf16.mxu0 0
    %70 = vmatpush1.bf16.msra.mxu0 %v47
    %71 = vmatprep.subr.bf16.mxu0 0
    %72 = vmatpush2.bf16.msra.mxu0 0
    %73 = vmatprep.subr.bf16.mxu0 0
    %74 = vmatpush2.bf16.msra.mxu0 0
    %75 = vmatprep.subr.bf16.mxu0 0
    %76 = vmatpush2.bf16.msra.mxu0 0
    %77 = vmatprep.subr.bf16.mxu0 0
    %78 = vmatpush2.bf16.msra.mxu0 0
    %79 = vmatprep.subr.bf16.mxu0 0
    %80 = vmatpush2.bf16.msra.mxu0 0
    %81 = vmatprep.subr.bf16.mxu0 0
    %82 = vmatpush2.bf16.msra.mxu0 0
    %83 = vmatprep.subr.bf16.mxu0 0
    %84 = vmatpush2.bf16.msra.mxu0 0
    %85 = vmatprep.subr.bf16.mxu0 0
    %86 = vmatpush2.bf16.msra.mxu0 0
    %87 = vmatprep.mubr.bf16.mxu0 0
    %88 = vmatmul.mubr.bf16.gmra.mxu0 %v53
    %v89 = vpop.f32.mrf.mxu0
    %v90 = vadd.f32 0.0, %v89
    %v91 = vpop.f32.mrf.mxu0
    %v92 = vpop.f32.mrf.mxu0
    %v93 = vadd.f32 0.0, %v92
    %v94 = vpop.f32.mrf.mxu0
    %95 = vdwg.mxu0
    %v96 = vld [vmem:[%s2] sm:$0xf]
    %v97 = vld [vmem:[%s2 + $0x4] sm:$0xf]
    %v98 = vld [vmem:[%s2 + $0x8] sm:$0xf]
    %v99 = vld [vmem:[%s2 + $0xc] sm:$0xf]
    %v104 = vunpack.c.l.b16 %v96
    %v105 = vunpack.c.l.b16 %v97
    %v106 = vunpack.c.l.b16 %v98
    %v107 = vunpack.c.l.b16 %v99
    %v108 = vpack.c.b16 %v105, %v104
    %v109 = vpack.c.b16 %v107, %v106
    %112 = vmatprep.subr.bf16.mxu0 0
    %113 = vmatpush1.bf16.msra.mxu0 0
    %114 = vmatprep.subr.bf16.mxu0 0
    %115 = vmatpush1.bf16.msra.mxu0 0
    %116 = vmatprep.subr.bf16.mxu0 0
    %117 = vmatpush1.bf16.msra.mxu0 0
    %118 = vmatprep.subr.bf16.mxu0 0
    %119 = vmatpush1.bf16.msra.mxu0 0
    %120 = vmatprep.subr.bf16.mxu0 0
    %121 = vmatpush1.bf16.msra.mxu0 0
    %122 = vmatprep.subr.bf16.mxu0 0
    %123 = vmatpush1.bf16.msra.mxu0 0
    %124 = vmatprep.subr.bf16.mxu0 0
    %125 = vmatpush1.bf16.msra.mxu0 %v109
    %126 = vmatprep.subr.bf16.mxu0 0
    %127 = vmatpush1.bf16.msra.mxu0 %v108
    %128 = vmatprep.subr.bf16.mxu0 0
    %129 = vmatpush2.bf16.msra.mxu0 0
    %130 = vmatprep.subr.bf16.mxu0 0
    %131 = vmatpush2.bf16.msra.mxu0 0
    %132 = vmatprep.subr.bf16.mxu0 0
    %133 = vmatpush2.bf16.msra.mxu0 0
    %134 = vmatprep.subr.bf16.mxu0 0
    %135 = vmatpush2.bf16.msra.mxu0 0
    %136 = vmatprep.subr.bf16.mxu0 0
    %137 = vmatpush2.bf16.msra.mxu0 0
    %138 = vmatprep.subr.bf16.mxu0 0
    %139 = vmatpush2.bf16.msra.mxu0 0
    %140 = vmatprep.subr.bf16.mxu0 0
    %141 = vmatpush2.bf16.msra.mxu0 0
    %142 = vmatprep.subr.bf16.mxu0 0
    %143 = vmatpush2.bf16.msra.mxu0 0
    %144 = vmatprep.mubr.bf16.mxu0 0
    %145 = vmatmul.mubr.bf16.gmra.mxu0 %v53
    %v146 = vpop.f32.mrf.mxu0
    %v147 = vadd.f32 0.0, %v146
    %v148 = vpop.f32.mrf.mxu0
    %v149 = vpop.f32.mrf.mxu0
    %v150 = vadd.f32 0.0, %v149
    %v151 = vpop.f32.mrf.mxu0
    %152 = vdwg.mxu0
    %v153 = vld [vmem:[%s3] sm:$0xf]
    %v154 = vld [vmem:[%s3 + $0x4] sm:$0xf]
    %v155 = vld [vmem:[%s3 + $0x8] sm:$0xf]
    %v156 = vld [vmem:[%s3 + $0xc] sm:$0xf]
    %v161 = vunpack.c.l.b16 %v153
    %v162 = vunpack.c.l.b16 %v154
    %v163 = vunpack.c.l.b16 %v155
    %v164 = vunpack.c.l.b16 %v156
    %v165 = vpack.c.b16 %v162, %v161
    %v166 = vpack.c.b16 %v164, %v163
    %169 = vmatprep.subr.bf16.mxu0 0
    %170 = vmatpush1.bf16.msra.mxu0 0
    %171 = vmatprep.subr.bf16.mxu0 0
    %172 = vmatpush1.bf16.msra.mxu0 0
    %173 = vmatprep.subr.bf16.mxu0 0
    %174 = vmatpush1.bf16.msra.mxu0 0
    %175 = vmatprep.subr.bf16.mxu0 0
    %176 = vmatpush1.bf16.msra.mxu0 0
    %177 = vmatprep.subr.bf16.mxu0 0
    %178 = vmatpush1.bf16.msra.mxu0 0
    %179 = vmatprep.subr.bf16.mxu0 0
    %180 = vmatpush1.bf16.msra.mxu0 0
    %181 = vmatprep.subr.bf16.mxu0 0
    %182 = vmatpush1.bf16.msra.mxu0 %v166
    %183 = vmatprep.subr.bf16.mxu0 0
    %184 = vmatpush1.bf16.msra.mxu0 %v165
    %185 = vmatprep.subr.bf16.mxu0 0
    %186 = vmatpush2.bf16.msra.mxu0 0
    %187 = vmatprep.subr.bf16.mxu0 0
    %188 = vmatpush2.bf16.msra.mxu0 0
    %189 = vmatprep.subr.bf16.mxu0 0
    %190 = vmatpush2.bf16.msra.mxu0 0
    %191 = vmatprep.subr.bf16.mxu0 0
    %192 = vmatpush2.bf16.msra.mxu0 0
    %193 = vmatprep.subr.bf16.mxu0 0
    %194 = vmatpush2.bf16.msra.mxu0 0
    %195 = vmatprep.subr.bf16.mxu0 0
    %196 = vmatpush2.bf16.msra.mxu0 0
    %197 = vmatprep.subr.bf16.mxu0 0
    %198 = vmatpush2.bf16.msra.mxu0 0
    %199 = vmatprep.subr.bf16.mxu0 0
    %200 = vmatpush2.bf16.msra.mxu0 0
    %201 = vmatprep.mubr.bf16.mxu0 0
    %202 = vmatmul.mubr.bf16.gmra.mxu0 %v53
    %v203 = vpop.f32.mrf.mxu0
    %v204 = vadd.f32 0.0, %v203
    %v205 = vpop.f32.mrf.mxu0
    %v206 = vpop.f32.mrf.mxu0
    %v207 = vadd.f32 0.0, %v206
    %v208 = vpop.f32.mrf.mxu0
    %209 = vdwg.mxu0
    %v210 = vpack.c.bf16 %v90, %v90
    %v211 = vpack.c.bf16 %v93, %v93
    %v212 = vpack.c.bf16 %v147, %v147
    %v213 = vpack.c.bf16 %v150, %v150
    %v214 = vpack.c.bf16 %v204, %v204
    %v215 = vpack.c.bf16 %v207, %v207
    %v216 = vld [vmem:[%s4] sm:$0xff]
    %vm217 = vcmask 130048
    %v219 = vsel %vm217, %v210, 0
    %v222 = vsel %vm217, %v212, 0
    %224 = vmatprep.subr.bf16.mxu0 0
    %225 = vmatpush1.bf16.xpose.msra.mxu0 0
    %226 = vmatprep.subr.bf16.mxu0 0
    %227 = vmatpush1.bf16.xpose.msra.mxu0 0
    %228 = vmatprep.subr.bf16.mxu0 0
    %229 = vmatpush1.bf16.xpose.msra.mxu0 0
    %230 = vmatprep.subr.bf16.mxu0 0
    %231 = vmatpush1.bf16.xpose.msra.mxu0 0
    %232 = vmatprep.subr.bf16.mxu0 0
    %233 = vmatpush1.bf16.xpose.msra.mxu0 0
    %234 = vmatprep.subr.bf16.mxu0 0
    %235 = vmatpush1.bf16.xpose.msra.mxu0 0
    %236 = vmatprep.subr.bf16.mxu0 0
    %237 = vmatpush1.bf16.xpose.msra.mxu0 0
    %238 = vmatprep.subr.bf16.mxu0 0
    %239 = vmatpush1.bf16.xpose.msra.mxu0 %v222
    %240 = vmatprep.subr.bf16.mxu0 0
    %241 = vmatpush2.bf16.xpose.msra.mxu0 0
    %242 = vmatprep.subr.bf16.mxu0 0
    %243 = vmatpush2.bf16.xpose.msra.mxu0 0
    %244 = vmatprep.subr.bf16.mxu0 0
    %245 = vmatpush2.bf16.xpose.msra.mxu0 0
    %246 = vmatprep.subr.bf16.mxu0 0
    %247 = vmatpush2.bf16.xpose.msra.mxu0 0
    %248 = vmatprep.subr.bf16.mxu0 0
    %249 = vmatpush2.bf16.xpose.msra.mxu0 0
    %250 = vmatprep.subr.bf16.mxu0 0
    %251 = vmatpush2.bf16.xpose.msra.mxu0 0
    %252 = vmatprep.subr.bf16.mxu0 0
    %253 = vmatpush2.bf16.xpose.msra.mxu0 0
    %254 = vmatprep.subr.bf16.mxu0 0
    %255 = vmatpush2.bf16.xpose.msra.mxu0 0
    %256 = vmatprep.mubr.bf16.mxu0 0
    %257 = vmatmul.mubr.bf16.gmra.mxu0 %v219
    %v258 = vpop.f32.mrf.mxu0
    %v259 = vadd.f32 %v216, %v258
    %v260 = vpop.f32.mrf.mxu0
    %v261 = vpop.f32.mrf.mxu0
    %v262 = vpop.f32.mrf.mxu0
    %263 = vdwg.mxu0
    %v265 = vsel %vm217, %v211, 0
    %v268 = vsel %vm217, %v213, 0
    %270 = vmatprep.subr.bf16.mxu0 0
    %271 = vmatpush1.bf16.xpose.msra.mxu0 0
    %272 = vmatprep.subr.bf16.mxu0 0
    %273 = vmatpush1.bf16.xpose.msra.mxu0 0
    %274 = vmatprep.subr.bf16.mxu0 0
    %275 = vmatpush1.bf16.xpose.msra.mxu0 0
    %276 = vmatprep.subr.bf16.mxu0 0
    %277 = vmatpush1.bf16.xpose.msra.mxu0 0
    %278 = vmatprep.subr.bf16.mxu0 0
    %279 = vmatpush1.bf16.xpose.msra.mxu0 0
    %280 = vmatprep.subr.bf16.mxu0 0
    %281 = vmatpush1.bf16.xpose.msra.mxu0 0
    %282 = vmatprep.subr.bf16.mxu0 0
    %283 = vmatpush1.bf16.xpose.msra.mxu0 0
    %284 = vmatprep.subr.bf16.mxu0 0
    %285 = vmatpush1.bf16.xpose.msra.mxu0 %v268
    %286 = vmatprep.subr.bf16.mxu0 0
    %287 = vmatpush2.bf16.xpose.msra.mxu0 0
    %288 = vmatprep.subr.bf16.mxu0 0
    %289 = vmatpush2.bf16.xpose.msra.mxu0 0
    %290 = vmatprep.subr.bf16.mxu0 0
    %291 = vmatpush2.bf16.xpose.msra.mxu0 0
    %292 = vmatprep.subr.bf16.mxu0 0
    %293 = vmatpush2.bf16.xpose.msra.mxu0 0
    %294 = vmatprep.subr.bf16.mxu0 0
    %295 = vmatpush2.bf16.xpose.msra.mxu0 0
    %296 = vmatprep.subr.bf16.mxu0 0
    %297 = vmatpush2.bf16.xpose.msra.mxu0 0
    %298 = vmatprep.subr.bf16.mxu0 0
    %299 = vmatpush2.bf16.xpose.msra.mxu0 0
    %300 = vmatprep.subr.bf16.mxu0 0
    %301 = vmatpush2.bf16.xpose.msra.mxu0 0
    %302 = vmatprep.mubr.bf16.mxu0 0
    %303 = vmatmul.mubr.bf16.gmra.mxu0 %v265
    %v304 = vpop.f32.mrf.mxu0
    %v305 = vadd.f32 %v216, %v304
    %v306 = vpop.f32.mrf.mxu0
    %v307 = vpop.f32.mrf.mxu0
    %v308 = vpop.f32.mrf.mxu0
    %309 = vdwg.mxu0
    %vm310 = vcmask 64512
    %v311 = vsel %vm310, %v259, -inf
    %312 = vmax.xlane.f32.xlu0 %v311
    %v313 = vpop.xlane.xlu0 %312
    %v314 = vsel %vm310, %v305, -inf
    %315 = vmax.xlane.f32.xlu0 %v314
    %v316 = vpop.xlane.xlu0 %315
    %v317 = vsub.f32 %v259, %v313
    %v318 = vsub.f32 %v305, %v316
    %v319 = vmul.f32 %v317, 1.442695
    %v320 = vpow.pop %v319
    %v321 = vmul.f32 %v318, 1.442695
    %v322 = vpow.pop %v321
    %v323 = vsel %vm310, %v320, 0.0
    %324 = vadd.xlane.f32.xlu0 %v323
    %v325 = vpop.xlane.xlu0 %324
    %v326 = vsel %vm310, %v322, 0.0
    %327 = vadd.xlane.f32.xlu0 %v326
    %v328 = vpop.xlane.xlu0 %327
    %v329 = vrcp.pop %v325
    %v330 = vrcp.pop %v328
    %v331 = vmul.f32 %v320, %v329
    %v332 = vmul.f32 %v322, %v330
    %v333 = vpack.c.bf16 %v331, %v331
    %v334 = vpack.c.bf16 %v332, %v332
    %v336 = vsel %vm310, %v333, 0
    %vm338 = vcmask 1043456
    %v340 = vsel %vm338, %v214, 0
    %342 = vmatprep.subr.bf16.mxu0 0
    %343 = vmatpush1.bf16.msra.mxu0 0
    %344 = vmatprep.subr.bf16.mxu0 0
    %345 = vmatpush1.bf16.msra.mxu0 0
    %346 = vmatprep.subr.bf16.mxu0 0
    %347 = vmatpush1.bf16.msra.mxu0 0
    %348 = vmatprep.subr.bf16.mxu0 0
    %349 = vmatpush1.bf16.msra.mxu0 0
    %350 = vmatprep.subr.bf16.mxu0 0
    %351 = vmatpush1.bf16.msra.mxu0 0
    %352 = vmatprep.subr.bf16.mxu0 0
    %353 = vmatpush1.bf16.msra.mxu0 0
    %354 = vmatprep.subr.bf16.mxu0 0
    %355 = vmatpush1.bf16.msra.mxu0 0
    %356 = vmatprep.subr.bf16.mxu0 0
    %357 = vmatpush1.bf16.msra.mxu0 %v340
    %358 = vmatprep.subr.bf16.mxu0 0
    %359 = vmatpush2.bf16.msra.mxu0 0
    %360 = vmatprep.subr.bf16.mxu0 0
    %361 = vmatpush2.bf16.msra.mxu0 0
    %362 = vmatprep.subr.bf16.mxu0 0
    %363 = vmatpush2.bf16.msra.mxu0 0
    %364 = vmatprep.subr.bf16.mxu0 0
    %365 = vmatpush2.bf16.msra.mxu0 0
    %366 = vmatprep.subr.bf16.mxu0 0
    %367 = vmatpush2.bf16.msra.mxu0 0
    %368 = vmatprep.subr.bf16.mxu0 0
    %369 = vmatpush2.bf16.msra.mxu0 0
    %370 = vmatprep.subr.bf16.mxu0 0
    %371 = vmatpush2.bf16.msra.mxu0 0
    %372 = vmatprep.subr.bf16.mxu0 0
    %373 = vmatpush2.bf16.msra.mxu0 0
    %374 = vmatprep.mubr.bf16.mxu0 0
    %375 = vmatmul.mubr.bf16.gmra.mxu0 %v336
    %v376 = vpop.f32.mrf.mxu0
    %v377 = vadd.f32 0.0, %v376
    %v378 = vpop.f32.mrf.mxu0
    %v379 = vpop.f32.mrf.mxu0
    %v380 = vpop.f32.mrf.mxu0
    %381 = vdwg.mxu0
    %v383 = vsel %vm310, %v334, 0
    %v386 = vsel %vm338, %v215, 0
    %388 = vmatprep.subr.bf16.mxu0 0
    %389 = vmatpush1.bf16.msra.mxu0 0
    %390 = vmatprep.subr.bf16.mxu0 0
    %391 = vmatpush1.bf16.msra.mxu0 0
    %392 = vmatprep.subr.bf16.mxu0 0
    %393 = vmatpush1.bf16.msra.mxu0 0
    %394 = vmatprep.subr.bf16.mxu0 0
    %395 = vmatpush1.bf16.msra.mxu0 0
    %396 = vmatprep.subr.bf16.mxu0 0
    %397 = vmatpush1.bf16.msra.mxu0 0
    %398 = vmatprep.subr.bf16.mxu0 0
    %399 = vmatpush1.bf16.msra.mxu0 0
    %400 = vmatprep.subr.bf16.mxu0 0
    %401 = vmatpush1.bf16.msra.mxu0 0
    %402 = vmatprep.subr.bf16.mxu0 0
    %403 = vmatpush1.bf16.msra.mxu0 %v386
    %404 = vmatprep.subr.bf16.mxu0 0
    %405 = vmatpush2.bf16.msra.mxu0 0
    %406 = vmatprep.subr.bf16.mxu0 0
    %407 = vmatpush2.bf16.msra.mxu0 0
    %408 = vmatprep.subr.bf16.mxu0 0
    %409 = vmatpush2.bf16.msra.mxu0 0
    %410 = vmatprep.subr.bf16.mxu0 0
    %411 = vmatpush2.bf16.msra.mxu0 0
    %412 = vmatprep.subr.bf16.mxu0 0
    %413 = vmatpush2.bf16.msra.mxu0 0
    %414 = vmatprep.subr.bf16.mxu0 0
    %415 = vmatpush2.bf16.msra.mxu0 0
    %416 = vmatprep.subr.bf16.mxu0 0
    %417 = vmatpush2.bf16.msra.mxu0 0
    %418 = vmatprep.subr.bf16.mxu0 0
    %419 = vmatpush2.bf16.msra.mxu0 0
    %420 = vmatprep.mubr.bf16.mxu0 0
    %421 = vmatmul.mubr.bf16.gmra.mxu0 %v383
    %v422 = vpop.f32.mrf.mxu0
    %v423 = vadd.f32 0.0, %v422
    %v424 = vpop.f32.mrf.mxu0
    %v425 = vpop.f32.mrf.mxu0
    %v426 = vpop.f32.mrf.mxu0
    %427 = vdwg.mxu0
    %v428 = vpack.c.bf16 %v423, %v377
    %v429 = vld [vmem:[%s5] sm:$0xf]
    %v430 = vld [vmem:[%s5 + $0x4] sm:$0xf]
    %s431 = scalar_lea.vmem %s1, 16
    %v432 = vld [vmem:[%s431] sm:$0xf]
    %v433 = vld [vmem:[%s431 + $0x4] sm:$0xf]
    %v434 = vld [vmem:[%s431 + $0x8] sm:$0xf]
    %v435 = vld [vmem:[%s431 + $0xc] sm:$0xf]
    %v440 = vunpack.c.l.b16 %v432
    %v441 = vunpack.c.l.b16 %v433
    %v442 = vunpack.c.l.b16 %v434
    %v443 = vunpack.c.l.b16 %v435
    %v444 = vpack.c.b16 %v441, %v440
    %v445 = vpack.c.b16 %v443, %v442
    %448 = vmatprep.subr.bf16.mxu0 0
    %449 = vmatpush1.bf16.msra.mxu0 0
    %450 = vmatprep.subr.bf16.mxu0 0
    %451 = vmatpush1.bf16.msra.mxu0 0
    %452 = vmatprep.subr.bf16.mxu0 0
    %453 = vmatpush1.bf16.msra.mxu0 0
    %454 = vmatprep.subr.bf16.mxu0 0
    %455 = vmatpush1.bf16.msra.mxu0 0
    %456 = vmatprep.subr.bf16.mxu0 0
    %457 = vmatpush1.bf16.msra.mxu0 0
    %458 = vmatprep.subr.bf16.mxu0 0
    %459 = vmatpush1.bf16.msra.mxu0 0
    %460 = vmatprep.subr.bf16.mxu0 0
    %461 = vmatpush1.bf16.msra.mxu0 %v445
    %462 = vmatprep.subr.bf16.mxu0 0
    %463 = vmatpush1.bf16.msra.mxu0 %v444
    %464 = vmatprep.subr.bf16.mxu0 0
    %465 = vmatpush2.bf16.msra.mxu0 0
    %466 = vmatprep.subr.bf16.mxu0 0
    %467 = vmatpush2.bf16.msra.mxu0 0
    %468 = vmatprep.subr.bf16.mxu0 0
    %469 = vmatpush2.bf16.msra.mxu0 0
    %470 = vmatprep.subr.bf16.mxu0 0
    %471 = vmatpush2.bf16.msra.mxu0 0
    %472 = vmatprep.subr.bf16.mxu0 0
    %473 = vmatpush2.bf16.msra.mxu0 0
    %474 = vmatprep.subr.bf16.mxu0 0
    %475 = vmatpush2.bf16.msra.mxu0 0
    %476 = vmatprep.subr.bf16.mxu0 0
    %477 = vmatpush2.bf16.msra.mxu0 0
    %478 = vmatprep.subr.bf16.mxu0 0
    %479 = vmatpush2.bf16.msra.mxu0 0
    %480 = vmatprep.mubr.bf16.mxu0 0
    %481 = vmatmul.mubr.bf16.gmra.mxu0 %v53
    %v482 = vpop.f32.mrf.mxu0
    %v483 = vadd.f32 0.0, %v482
    %v484 = vpop.f32.mrf.mxu0
    %v485 = vpop.f32.mrf.mxu0
    %v486 = vadd.f32 0.0, %v485
    %v487 = vpop.f32.mrf.mxu0
    %488 = vdwg.mxu0
    %s489 = scalar_lea.vmem %s2, 16
    %v490 = vld [vmem:[%s489] sm:$0xf]
    %v491 = vld [vmem:[%s489 + $0x4] sm:$0xf]
    %v492 = vld [vmem:[%s489 + $0x8] sm:$0xf]
    %v493 = vld [vmem:[%s489 + $0xc] sm:$0xf]
    %v498 = vunpack.c.l.b16 %v490
    %v499 = vunpack.c.l.b16 %v491
    %v500 = vunpack.c.l.b16 %v492
    %v501 = vunpack.c.l.b16 %v493
    %v502 = vpack.c.b16 %v499, %v498
    %v503 = vpack.c.b16 %v501, %v500
    %506 = vmatprep.subr.bf16.mxu0 0
    %507 = vmatpush1.bf16.msra.mxu0 0
    %508 = vmatprep.subr.bf16.mxu0 0
    %509 = vmatpush1.bf16.msra.mxu0 0
    %510 = vmatprep.subr.bf16.mxu0 0
    %511 = vmatpush1.bf16.msra.mxu0 0
    %512 = vmatprep.subr.bf16.mxu0 0
    %513 = vmatpush1.bf16.msra.mxu0 0
    %514 = vmatprep.subr.bf16.mxu0 0
    %515 = vmatpush1.bf16.msra.mxu0 0
    %516 = vmatprep.subr.bf16.mxu0 0
    %517 = vmatpush1.bf16.msra.mxu0 0
    %518 = vmatprep.subr.bf16.mxu0 0
    %519 = vmatpush1.bf16.msra.mxu0 %v503
    %520 = vmatprep.subr.bf16.mxu0 0
    %521 = vmatpush1.bf16.msra.mxu0 %v502
    %522 = vmatprep.subr.bf16.mxu0 0
    %523 = vmatpush2.bf16.msra.mxu0 0
    %524 = vmatprep.subr.bf16.mxu0 0
    %525 = vmatpush2.bf16.msra.mxu0 0
    %526 = vmatprep.subr.bf16.mxu0 0
    %527 = vmatpush2.bf16.msra.mxu0 0
    %528 = vmatprep.subr.bf16.mxu0 0
    %529 = vmatpush2.bf16.msra.mxu0 0
    %530 = vmatprep.subr.bf16.mxu0 0
    %531 = vmatpush2.bf16.msra.mxu0 0
    %532 = vmatprep.subr.bf16.mxu0 0
    %533 = vmatpush2.bf16.msra.mxu0 0
    %534 = vmatprep.subr.bf16.mxu0 0
    %535 = vmatpush2.bf16.msra.mxu0 0
    %536 = vmatprep.subr.bf16.mxu0 0
    %537 = vmatpush2.bf16.msra.mxu0 0
    %538 = vmatprep.mubr.bf16.mxu0 0
    %539 = vmatmul.mubr.bf16.gmra.mxu0 %v53
    %v540 = vpop.f32.mrf.mxu0
    %v541 = vadd.f32 0.0, %v540
    %v542 = vpop.f32.mrf.mxu0
    %v543 = vpop.f32.mrf.mxu0
    %v544 = vadd.f32 0.0, %v543
    %v545 = vpop.f32.mrf.mxu0
    %546 = vdwg.mxu0
    %s547 = scalar_lea.vmem %s3, 16
    %v548 = vld [vmem:[%s547] sm:$0xf]
    %v549 = vld [vmem:[%s547 + $0x4] sm:$0xf]
    %v550 = vld [vmem:[%s547 + $0x8] sm:$0xf]
    %v551 = vld [vmem:[%s547 + $0xc] sm:$0xf]
    %v556 = vunpack.c.l.b16 %v548
    %v557 = vunpack.c.l.b16 %v549
    %v558 = vunpack.c.l.b16 %v550
    %v559 = vunpack.c.l.b16 %v551
    %v560 = vpack.c.b16 %v557, %v556
    %v561 = vpack.c.b16 %v559, %v558
    %564 = vmatprep.subr.bf16.mxu0 0
    %565 = vmatpush1.bf16.msra.mxu0 0
    %566 = vmatprep.subr.bf16.mxu0 0
    %567 = vmatpush1.bf16.msra.mxu0 0
    %568 = vmatprep.subr.bf16.mxu0 0
    %569 = vmatpush1.bf16.msra.mxu0 0
    %570 = vmatprep.subr.bf16.mxu0 0
    %571 = vmatpush1.bf16.msra.mxu0 0
    %572 = vmatprep.subr.bf16.mxu0 0
    %573 = vmatpush1.bf16.msra.mxu0 0
    %574 = vmatprep.subr.bf16.mxu0 0
    %575 = vmatpush1.bf16.msra.mxu0 0
    %576 = vmatprep.subr.bf16.mxu0 0
    %577 = vmatpush1.bf16.msra.mxu0 %v561
    %578 = vmatprep.subr.bf16.mxu0 0
    %579 = vmatpush1.bf16.msra.mxu0 %v560
    %580 = vmatprep.subr.bf16.mxu0 0
    %581 = vmatpush2.bf16.msra.mxu0 0
    %582 = vmatprep.subr.bf16.mxu0 0
    %583 = vmatpush2.bf16.msra.mxu0 0
    %584 = vmatprep.subr.bf16.mxu0 0
    %585 = vmatpush2.bf16.msra.mxu0 0
    %586 = vmatprep.subr.bf16.mxu0 0
    %587 = vmatpush2.bf16.msra.mxu0 0
    %588 = vmatprep.subr.bf16.mxu0 0
    %589 = vmatpush2.bf16.msra.mxu0 0
    %590 = vmatprep.subr.bf16.mxu0 0
    %591 = vmatpush2.bf16.msra.mxu0 0
    %592 = vmatprep.subr.bf16.mxu0 0
    %593 = vmatpush2.bf16.msra.mxu0 0
    %594 = vmatprep.subr.bf16.mxu0 0
    %595 = vmatpush2.bf16.msra.mxu0 0
    %596 = vmatprep.mubr.bf16.mxu0 0
    %597 = vmatmul.mubr.bf16.gmra.mxu0 %v53
    %v598 = vpop.f32.mrf.mxu0
    %v599 = vadd.f32 0.0, %v598
    %v600 = vpop.f32.mrf.mxu0
    %v601 = vpop.f32.mrf.mxu0
    %v602 = vadd.f32 0.0, %v601
    %v603 = vpop.f32.mrf.mxu0
    %604 = vdwg.mxu0
    %v605 = vpack.c.bf16 %v483, %v483
    %v606 = vpack.c.bf16 %v486, %v486
    %v607 = vpack.c.bf16 %v541, %v541
    %v608 = vpack.c.bf16 %v544, %v544
    %v609 = vpack.c.bf16 %v599, %v599
    %v610 = vpack.c.bf16 %v602, %v602
    %s611 = scalar_lea.vmem %s4, 8
    %v612 = vld [vmem:[%s611] sm:$0xff]
    %v614 = vsel %vm217, %v605, 0
    %v617 = vsel %vm217, %v607, 0
    %619 = vmatprep.subr.bf16.mxu0 0
    %620 = vmatpush1.bf16.xpose.msra.mxu0 0
    %621 = vmatprep.subr.bf16.mxu0 0
    %622 = vmatpush1.bf16.xpose.msra.mxu0 0
    %623 = vmatprep.subr.bf16.mxu0 0
    %624 = vmatpush1.bf16.xpose.msra.mxu0 0
    %625 = vmatprep.subr.bf16.mxu0 0
    %626 = vmatpush1.bf16.xpose.msra.mxu0 0
    %627 = vmatprep.subr.bf16.mxu0 0
    %628 = vmatpush1.bf16.xpose.msra.mxu0 0
    %629 = vmatprep.subr.bf16.mxu0 0
    %630 = vmatpush1.bf16.xpose.msra.mxu0 0
    %631 = vmatprep.subr.bf16.mxu0 0
    %632 = vmatpush1.bf16.xpose.msra.mxu0 0
    %633 = vmatprep.subr.bf16.mxu0 0
    %634 = vmatpush1.bf16.xpose.msra.mxu0 %v617
    %635 = vmatprep.subr.bf16.mxu0 0
    %636 = vmatpush2.bf16.xpose.msra.mxu0 0
    %637 = vmatprep.subr.bf16.mxu0 0
    %638 = vmatpush2.bf16.xpose.msra.mxu0 0
    %639 = vmatprep.subr.bf16.mxu0 0
    %640 = vmatpush2.bf16.xpose.msra.mxu0 0
    %641 = vmatprep.subr.bf16.mxu0 0
    %642 = vmatpush2.bf16.xpose.msra.mxu0 0
    %643 = vmatprep.subr.bf16.mxu0 0
    %644 = vmatpush2.bf16.xpose.msra.mxu0 0
    %645 = vmatprep.subr.bf16.mxu0 0
    %646 = vmatpush2.bf16.xpose.msra.mxu0 0
    %647 = vmatprep.subr.bf16.mxu0 0
    %648 = vmatpush2.bf16.xpose.msra.mxu0 0
    %649 = vmatprep.subr.bf16.mxu0 0
    %650 = vmatpush2.bf16.xpose.msra.mxu0 0
    %651 = vmatprep.mubr.bf16.mxu0 0
    %652 = vmatmul.mubr.bf16.gmra.mxu0 %v614
    %v653 = vpop.f32.mrf.mxu0
    %v654 = vadd.f32 %v612, %v653
    %v655 = vpop.f32.mrf.mxu0
    %v656 = vpop.f32.mrf.mxu0
    %v657 = vpop.f32.mrf.mxu0
    %658 = vdwg.mxu0
    %v660 = vsel %vm217, %v606, 0
    %v663 = vsel %vm217, %v608, 0
    %665 = vmatprep.subr.bf16.mxu0 0
    %666 = vmatpush1.bf16.xpose.msra.mxu0 0
    %667 = vmatprep.subr.bf16.mxu0 0
    %668 = vmatpush1.bf16.xpose.msra.mxu0 0
    %669 = vmatprep.subr.bf16.mxu0 0
    %670 = vmatpush1.bf16.xpose.msra.mxu0 0
    %671 = vmatprep.subr.bf16.mxu0 0
    %672 = vmatpush1.bf16.xpose.msra.mxu0 0
    %673 = vmatprep.subr.bf16.mxu0 0
    %674 = vmatpush1.bf16.xpose.msra.mxu0 0
    %675 = vmatprep.subr.bf16.mxu0 0
    %676 = vmatpush1.bf16.xpose.msra.mxu0 0
    %677 = vmatprep.subr.bf16.mxu0 0
    %678 = vmatpush1.bf16.xpose.msra.mxu0 0
    %679 = vmatprep.subr.bf16.mxu0 0
    %680 = vmatpush1.bf16.xpose.msra.mxu0 %v663
    %681 = vmatprep.subr.bf16.mxu0 0
    %682 = vmatpush2.bf16.xpose.msra.mxu0 0
    %683 = vmatprep.subr.bf16.mxu0 0
    %684 = vmatpush2.bf16.xpose.msra.mxu0 0
    %685 = vmatprep.subr.bf16.mxu0 0
    %686 = vmatpush2.bf16.xpose.msra.mxu0 0
    %687 = vmatprep.subr.bf16.mxu0 0
    %688 = vmatpush2.bf16.xpose.msra.mxu0 0
    %689 = vmatprep.subr.bf16.mxu0 0
    %690 = vmatpush2.bf16.xpose.msra.mxu0 0
    %691 = vmatprep.subr.bf16.mxu0 0
    %692 = vmatpush2.bf16.xpose.msra.mxu0 0
    %693 = vmatprep.subr.bf16.mxu0 0
    %694 = vmatpush2.bf16.xpose.msra.mxu0 0
    %695 = vmatprep.subr.bf16.mxu0 0
    %696 = vmatpush2.bf16.xpose.msra.mxu0 0
    %697 = vmatprep.mubr.bf16.mxu0 0
    %698 = vmatmul.mubr.bf16.gmra.mxu0 %v660
    %v699 = vpop.f32.mrf.mxu0
    %v700 = vadd.f32 %v612, %v699
    %v701 = vpop.f32.mrf.mxu0
    %v702 = vpop.f32.mrf.mxu0
    %v703 = vpop.f32.mrf.mxu0
    %704 = vdwg.mxu0
    %v705 = vsel %vm310, %v654, -inf
    %706 = vmax.xlane.f32.xlu0 %v705
    %v707 = vpop.xlane.xlu0 %706
    %v708 = vsel %vm310, %v700, -inf
    %709 = vmax.xlane.f32.xlu0 %v708
    %v710 = vpop.xlane.xlu0 %709
    %v711 = vsub.f32 %v654, %v707
    %v712 = vsub.f32 %v700, %v710
    %v713 = vmul.f32 %v711, 1.442695
    %v714 = vpow.pop %v713
    %v715 = vmul.f32 %v712, 1.442695
    %v716 = vpow.pop %v715
    %v717 = vsel %vm310, %v714, 0.0
    %718 = vadd.xlane.f32.xlu0 %v717
    %v719 = vpop.xlane.xlu0 %718
    %v720 = vsel %vm310, %v716, 0.0
    %721 = vadd.xlane.f32.xlu0 %v720
    %v722 = vpop.xlane.xlu0 %721
    %v723 = vrcp.pop %v719
    %v724 = vrcp.pop %v722
    %v725 = vmul.f32 %v714, %v723
    %v726 = vmul.f32 %v716, %v724
    %v727 = vpack.c.bf16 %v725, %v725
    %v728 = vpack.c.bf16 %v726, %v726
    %v730 = vsel %vm310, %v727, 0
    %v733 = vsel %vm338, %v609, 0
    %735 = vmatprep.subr.bf16.mxu0 0
    %736 = vmatpush1.bf16.msra.mxu0 0
    %737 = vmatprep.subr.bf16.mxu0 0
    %738 = vmatpush1.bf16.msra.mxu0 0
    %739 = vmatprep.subr.bf16.mxu0 0
    %740 = vmatpush1.bf16.msra.mxu0 0
    %741 = vmatprep.subr.bf16.mxu0 0
    %742 = vmatpush1.bf16.msra.mxu0 0
    %743 = vmatprep.subr.bf16.mxu0 0
    %744 = vmatpush1.bf16.msra.mxu0 0
    %745 = vmatprep.subr.bf16.mxu0 0
    %746 = vmatpush1.bf16.msra.mxu0 0
    %747 = vmatprep.subr.bf16.mxu0 0
    %748 = vmatpush1.bf16.msra.mxu0 0
    %749 = vmatprep.subr.bf16.mxu0 0
    %750 = vmatpush1.bf16.msra.mxu0 %v733
    %751 = vmatprep.subr.bf16.mxu0 0
    %752 = vmatpush2.bf16.msra.mxu0 0
    %753 = vmatprep.subr.bf16.mxu0 0
    %754 = vmatpush2.bf16.msra.mxu0 0
    %755 = vmatprep.subr.bf16.mxu0 0
    %756 = vmatpush2.bf16.msra.mxu0 0
    %757 = vmatprep.subr.bf16.mxu0 0
    %758 = vmatpush2.bf16.msra.mxu0 0
    %759 = vmatprep.subr.bf16.mxu0 0
    %760 = vmatpush2.bf16.msra.mxu0 0
    %761 = vmatprep.subr.bf16.mxu0 0
    %762 = vmatpush2.bf16.msra.mxu0 0
    %763 = vmatprep.subr.bf16.mxu0 0
    %764 = vmatpush2.bf16.msra.mxu0 0
    %765 = vmatprep.subr.bf16.mxu0 0
    %766 = vmatpush2.bf16.msra.mxu0 0
    %767 = vmatprep.mubr.bf16.mxu0 0
    %768 = vmatmul.mubr.bf16.gmra.mxu0 %v730
    %v769 = vpop.f32.mrf.mxu0
    %v770 = vadd.f32 0.0, %v769
    %v771 = vpop.f32.mrf.mxu0
    %v772 = vpop.f32.mrf.mxu0
    %v773 = vpop.f32.mrf.mxu0
    %774 = vdwg.mxu0
    %v776 = vsel %vm310, %v728, 0
    %v779 = vsel %vm338, %v610, 0
    %781 = vmatprep.subr.bf16.mxu0 0
    %782 = vmatpush1.bf16.msra.mxu0 0
    %783 = vmatprep.subr.bf16.mxu0 0
    %784 = vmatpush1.bf16.msra.mxu0 0
    %785 = vmatprep.subr.bf16.mxu0 0
    %786 = vmatpush1.bf16.msra.mxu0 0
    %787 = vmatprep.subr.bf16.mxu0 0
    %788 = vmatpush1.bf16.msra.mxu0 0
    %789 = vmatprep.subr.bf16.mxu0 0
    %790 = vmatpush1.bf16.msra.mxu0 0
    %791 = vmatprep.subr.bf16.mxu0 0
    %792 = vmatpush1.bf16.msra.mxu0 0
    %793 = vmatprep.subr.bf16.mxu0 0
    %794 = vmatpush1.bf16.msra.mxu0 0
    %795 = vmatprep.subr.bf16.mxu0 0
    %796 = vmatpush1.bf16.msra.mxu0 %v779
    %797 = vmatprep.subr.bf16.mxu0 0
    %798 = vmatpush2.bf16.msra.mxu0 0
    %799 = vmatprep.subr.bf16.mxu0 0
    %800 = vmatpush2.bf16.msra.mxu0 0
    %801 = vmatprep.subr.bf16.mxu0 0
    %802 = vmatpush2.bf16.msra.mxu0 0
    %803 = vmatprep.subr.bf16.mxu0 0
    %804 = vmatpush2.bf16.msra.mxu0 0
    %805 = vmatprep.subr.bf16.mxu0 0
    %806 = vmatpush2.bf16.msra.mxu0 0
    %807 = vmatprep.subr.bf16.mxu0 0
    %808 = vmatpush2.bf16.msra.mxu0 0
    %809 = vmatprep.subr.bf16.mxu0 0
    %810 = vmatpush2.bf16.msra.mxu0 0
    %811 = vmatprep.subr.bf16.mxu0 0
    %812 = vmatpush2.bf16.msra.mxu0 0
    %813 = vmatprep.mubr.bf16.mxu0 0
    %814 = vmatmul.mubr.bf16.gmra.mxu0 %v776
    %v815 = vpop.f32.mrf.mxu0
    %v816 = vadd.f32 0.0, %v815
    %v817 = vpop.f32.mrf.mxu0
    %v818 = vpop.f32.mrf.mxu0
    %v819 = vpop.f32.mrf.mxu0
    %820 = vdwg.mxu0
    %v821 = vpack.c.bf16 %v816, %v770
    %s822 = scalar_lea.vmem %s5, 8
    %v823 = vld [vmem:[%s822] sm:$0xf]
    %v824 = vld [vmem:[%s822 + $0x4] sm:$0xf]
    %v827 = vunpack.c.l.b16 %v823
    %v828 = vunpack.c.l.b16 %v824
    %v829 = vpack.c.b16 %v828, %v827
    %v832 = vsel %vm217, %v821, 0
    %834 = vmatprep.subr.bf16.mxu0 0
    %835 = vmatpush1.bf16.msra.mxu0 0
    %836 = vmatprep.subr.bf16.mxu0 0
    %837 = vmatpush1.bf16.msra.mxu0 0
    %838 = vmatprep.subr.bf16.mxu0 0
    %839 = vmatpush1.bf16.msra.mxu0 0
    %840 = vmatprep.subr.bf16.mxu0 0
    %841 = vmatpush1.bf16.msra.mxu0 0
    %842 = vmatprep.subr.bf16.mxu0 0
    %843 = vmatpush1.bf16.msra.mxu0 0
    %844 = vmatprep.subr.bf16.mxu0 0
    %845 = vmatpush1.bf16.msra.mxu0 0
    %846 = vmatprep.subr.bf16.mxu0 0
    %847 = vmatpush1.bf16.msra.mxu0 0
    %848 = vmatprep.subr.bf16.mxu0 0
    %849 = vmatpush1.bf16.msra.mxu0 %v829
    %850 = vmatprep.subr.bf16.mxu0 0
    %851 = vmatpush2.bf16.msra.mxu0 0
    %852 = vmatprep.subr.bf16.mxu0 0
    %853 = vmatpush2.bf16.msra.mxu0 0
    %854 = vmatprep.subr.bf16.mxu0 0
    %855 = vmatpush2.bf16.msra.mxu0 0
    %856 = vmatprep.subr.bf16.mxu0 0
    %857 = vmatpush2.bf16.msra.mxu0 0
    %858 = vmatprep.subr.bf16.mxu0 0
    %859 = vmatpush2.bf16.msra.mxu0 0
    %860 = vmatprep.subr.bf16.mxu0 0
    %861 = vmatpush2.bf16.msra.mxu0 0
    %862 = vmatprep.subr.bf16.mxu0 0
    %863 = vmatpush2.bf16.msra.mxu0 0
    %864 = vmatprep.subr.bf16.mxu0 0
    %865 = vmatpush2.bf16.msra.mxu0 0
    %866 = vmatprep.mubr.bf16.mxu0 0
    %867 = vmatmul.mubr.bf16.gmra.mxu0 %v832
    %v868 = vpop.f32.mrf.mxu0
    %v869 = vadd.f32 0.0, %v868
    %v870 = vpop.f32.mrf.mxu0
    %v871 = vpop.f32.mrf.mxu0
    %v872 = vadd.f32 0.0, %v871
    %v873 = vpop.f32.mrf.mxu0
    %874 = vdwg.mxu0
    %v877 = vunpack.c.l.b16 %v429
    %v878 = vunpack.c.l.b16 %v430
    %v879 = vpack.c.b16 %v878, %v877
    %v882 = vsel %vm217, %v428, 0
    %884 = vmatprep.subr.bf16.mxu0 0
    %885 = vmatpush1.bf16.msra.mxu0 0
    %886 = vmatprep.subr.bf16.mxu0 0
    %887 = vmatpush1.bf16.msra.mxu0 0
    %888 = vmatprep.subr.bf16.mxu0 0
    %889 = vmatpush1.bf16.msra.mxu0 0
    %890 = vmatprep.subr.bf16.mxu0 0
    %891 = vmatpush1.bf16.msra.mxu0 0
    %892 = vmatprep.subr.bf16.mxu0 0
    %893 = vmatpush1.bf16.msra.mxu0 0
    %894 = vmatprep.subr.bf16.mxu0 0
    %895 = vmatpush1.bf16.msra.mxu0 0
    %896 = vmatprep.subr.bf16.mxu0 0
    %897 = vmatpush1.bf16.msra.mxu0 0
    %898 = vmatprep.subr.bf16.mxu0 0
    %899 = vmatpush1.bf16.msra.mxu0 %v879
    %900 = vmatprep.subr.bf16.mxu0 0
    %901 = vmatpush2.bf16.msra.mxu0 0
    %902 = vmatprep.subr.bf16.mxu0 0
    %903 = vmatpush2.bf16.msra.mxu0 0
    %904 = vmatprep.subr.bf16.mxu0 0
    %905 = vmatpush2.bf16.msra.mxu0 0
    %906 = vmatprep.subr.bf16.mxu0 0
    %907 = vmatpush2.bf16.msra.mxu0 0
    %908 = vmatprep.subr.bf16.mxu0 0
    %909 = vmatpush2.bf16.msra.mxu0 0
    %910 = vmatprep.subr.bf16.mxu0 0
    %911 = vmatpush2.bf16.msra.mxu0 0
    %912 = vmatprep.subr.bf16.mxu0 0
    %913 = vmatpush2.bf16.msra.mxu0 0
    %914 = vmatprep.subr.bf16.mxu0 0
    %915 = vmatpush2.bf16.msra.mxu0 0
    %916 = vmatprep.mubr.bf16.mxu0 0
    %917 = vmatmul.mubr.bf16.gmra.mxu0 %v882
    %v918 = vpop.f32.mrf.mxu0
    %v919 = vadd.f32 %v869, %v918
    %v920 = vpop.f32.mrf.mxu0
    %v921 = vpop.f32.mrf.mxu0
    %v922 = vadd.f32 %v872, %v921
    %v923 = vpop.f32.mrf.mxu0
    %924 = vdwg.mxu0
    %s925 = scalar_lea.vmem %s1, 32
    %v926 = vld [vmem:[%s925] sm:$0xf]
    %v927 = vld [vmem:[%s925 + $0x4] sm:$0xf]
    %v928 = vld [vmem:[%s925 + $0x8] sm:$0xf]
    %v929 = vld [vmem:[%s925 + $0xc] sm:$0xf]
    %v934 = vunpack.c.l.b16 %v926
    %v935 = vunpack.c.l.b16 %v927
    %v936 = vunpack.c.l.b16 %v928
    %v937 = vunpack.c.l.b16 %v929
    %v938 = vpack.c.b16 %v935, %v934
    %v939 = vpack.c.b16 %v937, %v936
    %942 = vmatprep.subr.bf16.mxu0 0
    %943 = vmatpush1.bf16.msra.mxu0 0
    %944 = vmatprep.subr.bf16.mxu0 0
    %945 = vmatpush1.bf16.msra.mxu0 0
    %946 = vmatprep.subr.bf16.mxu0 0
    %947 = vmatpush1.bf16.msra.mxu0 0
    %948 = vmatprep.subr.bf16.mxu0 0
    %949 = vmatpush1.bf16.msra.mxu0 0
    %950 = vmatprep.subr.bf16.mxu0 0
    %951 = vmatpush1.bf16.msra.mxu0 0
    %952 = vmatprep.subr.bf16.mxu0 0
    %953 = vmatpush1.bf16.msra.mxu0 0
    %954 = vmatprep.subr.bf16.mxu0 0
    %955 = vmatpush1.bf16.msra.mxu0 %v939
    %956 = vmatprep.subr.bf16.mxu0 0
    %957 = vmatpush1.bf16.msra.mxu0 %v938
    %958 = vmatprep.subr.bf16.mxu0 0
    %959 = vmatpush2.bf16.msra.mxu0 0
    %960 = vmatprep.subr.bf16.mxu0 0
    %961 = vmatpush2.bf16.msra.mxu0 0
    %962 = vmatprep.subr.bf16.mxu0 0
    %963 = vmatpush2.bf16.msra.mxu0 0
    %964 = vmatprep.subr.bf16.mxu0 0
    %965 = vmatpush2.bf16.msra.mxu0 0
    %966 = vmatprep.subr.bf16.mxu0 0
    %967 = vmatpush2.bf16.msra.mxu0 0
    %968 = vmatprep.subr.bf16.mxu0 0
    %969 = vmatpush2.bf16.msra.mxu0 0
    %970 = vmatprep.subr.bf16.mxu0 0
    %971 = vmatpush2.bf16.msra.mxu0 0
    %972 = vmatprep.subr.bf16.mxu0 0
    %973 = vmatpush2.bf16.msra.mxu0 0
    %974 = vmatprep.mubr.bf16.mxu0 0
    %975 = vmatmul.mubr.bf16.gmra.mxu0 %v53
    %v976 = vpop.f32.mrf.mxu0
    %v977 = vadd.f32 0.0, %v976
    %v978 = vpop.f32.mrf.mxu0
    %v979 = vpop.f32.mrf.mxu0
    %v980 = vadd.f32 0.0, %v979
    %v981 = vpop.f32.mrf.mxu0
    %982 = vdwg.mxu0
    %s983 = scalar_lea.vmem %s2, 32
    %v984 = vld [vmem:[%s983] sm:$0xf]
    %v985 = vld [vmem:[%s983 + $0x4] sm:$0xf]
    %v986 = vld [vmem:[%s983 + $0x8] sm:$0xf]
    %v987 = vld [vmem:[%s983 + $0xc] sm:$0xf]
    %v992 = vunpack.c.l.b16 %v984
    %v993 = vunpack.c.l.b16 %v985
    %v994 = vunpack.c.l.b16 %v986
    %v995 = vunpack.c.l.b16 %v987
    %v996 = vpack.c.b16 %v993, %v992
    %v997 = vpack.c.b16 %v995, %v994
    %1000 = vmatprep.subr.bf16.mxu0 0
    %1001 = vmatpush1.bf16.msra.mxu0 0
    %1002 = vmatprep.subr.bf16.mxu0 0
    %1003 = vmatpush1.bf16.msra.mxu0 0
    %1004 = vmatprep.subr.bf16.mxu0 0
    %1005 = vmatpush1.bf16.msra.mxu0 0
    %1006 = vmatprep.subr.bf16.mxu0 0
    %1007 = vmatpush1.bf16.msra.mxu0 0
    %1008 = vmatprep.subr.bf16.mxu0 0
    %1009 = vmatpush1.bf16.msra.mxu0 0
    %1010 = vmatprep.subr.bf16.mxu0 0
    %1011 = vmatpush1.bf16.msra.mxu0 0
    %1012 = vmatprep.subr.bf16.mxu0 0
    %1013 = vmatpush1.bf16.msra.mxu0 %v997
    %1014 = vmatprep.subr.bf16.mxu0 0
    %1015 = vmatpush1.bf16.msra.mxu0 %v996
    %1016 = vmatprep.subr.bf16.mxu0 0
    %1017 = vmatpush2.bf16.msra.mxu0 0
    %1018 = vmatprep.subr.bf16.mxu0 0
    %1019 = vmatpush2.bf16.msra.mxu0 0
    %1020 = vmatprep.subr.bf16.mxu0 0
    %1021 = vmatpush2.bf16.msra.mxu0 0
    %1022 = vmatprep.subr.bf16.mxu0 0
    %1023 = vmatpush2.bf16.msra.mxu0 0
    %1024 = vmatprep.subr.bf16.mxu0 0
    %1025 = vmatpush2.bf16.msra.mxu0 0
    %1026 = vmatprep.subr.bf16.mxu0 0
    %1027 = vmatpush2.bf16.msra.mxu0 0
    %1028 = vmatprep.subr.bf16.mxu0 0
    %1029 = vmatpush2.bf16.msra.mxu0 0
    %1030 = vmatprep.subr.bf16.mxu0 0
    %1031 = vmatpush2.bf16.msra.mxu0 0
    %1032 = vmatprep.mubr.bf16.mxu0 0
    %1033 = vmatmul.mubr.bf16.gmra.mxu0 %v53
    %v1034 = vpop.f32.mrf.mxu0
    %v1035 = vadd.f32 0.0, %v1034
    %v1036 = vpop.f32.mrf.mxu0
    %v1037 = vpop.f32.mrf.mxu0
    %v1038 = vadd.f32 0.0, %v1037
    %v1039 = vpop.f32.mrf.mxu0
    %1040 = vdwg.mxu0
    %s1041 = scalar_lea.vmem %s3, 32
    %v1042 = vld [vmem:[%s1041] sm:$0xf]
    %v1043 = vld [vmem:[%s1041 + $0x4] sm:$0xf]
    %v1044 = vld [vmem:[%s1041 + $0x8] sm:$0xf]
    %v1045 = vld [vmem:[%s1041 + $0xc] sm:$0xf]
    %v1050 = vunpack.c.l.b16 %v1042
    %v1051 = vunpack.c.l.b16 %v1043
    %v1052 = vunpack.c.l.b16 %v1044
    %v1053 = vunpack.c.l.b16 %v1045
    %v1054 = vpack.c.b16 %v1051, %v1050
    %v1055 = vpack.c.b16 %v1053, %v1052
    %1058 = vmatprep.subr.bf16.mxu0 0
    %1059 = vmatpush1.bf16.msra.mxu0 0
    %1060 = vmatprep.subr.bf16.mxu0 0
    %1061 = vmatpush1.bf16.msra.mxu0 0
    %1062 = vmatprep.subr.bf16.mxu0 0
    %1063 = vmatpush1.bf16.msra.mxu0 0
    %1064 = vmatprep.subr.bf16.mxu0 0
    %1065 = vmatpush1.bf16.msra.mxu0 0
    %1066 = vmatprep.subr.bf16.mxu0 0
    %1067 = vmatpush1.bf16.msra.mxu0 0
    %1068 = vmatprep.subr.bf16.mxu0 0
    %1069 = vmatpush1.bf16.msra.mxu0 0
    %1070 = vmatprep.subr.bf16.mxu0 0
    %1071 = vmatpush1.bf16.msra.mxu0 %v1055
    %1072 = vmatprep.subr.bf16.mxu0 0
    %1073 = vmatpush1.bf16.msra.mxu0 %v1054
    %1074 = vmatprep.subr.bf16.mxu0 0
    %1075 = vmatpush2.bf16.msra.mxu0 0
    %1076 = vmatprep.subr.bf16.mxu0 0
    %1077 = vmatpush2.bf16.msra.mxu0 0
    %1078 = vmatprep.subr.bf16.mxu0 0
    %1079 = vmatpush2.bf16.msra.mxu0 0
    %1080 = vmatprep.subr.bf16.mxu0 0
    %1081 = vmatpush2.bf16.msra.mxu0 0
    %1082 = vmatprep.subr.bf16.mxu0 0
    %1083 = vmatpush2.bf16.msra.mxu0 0
    %1084 = vmatprep.subr.bf16.mxu0 0
    %1085 = vmatpush2.bf16.msra.mxu0 0
    %1086 = vmatprep.subr.bf16.mxu0 0
    %1087 = vmatpush2.bf16.msra.mxu0 0
    %1088 = vmatprep.subr.bf16.mxu0 0
    %1089 = vmatpush2.bf16.msra.mxu0 0
    %1090 = vmatprep.mubr.bf16.mxu0 0
    %1091 = vmatmul.mubr.bf16.gmra.mxu0 %v53
    %v1092 = vpop.f32.mrf.mxu0
    %v1093 = vadd.f32 0.0, %v1092
    %v1094 = vpop.f32.mrf.mxu0
    %v1095 = vpop.f32.mrf.mxu0
    %v1096 = vadd.f32 0.0, %v1095
    %v1097 = vpop.f32.mrf.mxu0
    %1098 = vdwg.mxu0
    %v1099 = vpack.c.bf16 %v977, %v977
    %v1100 = vpack.c.bf16 %v980, %v980
    %v1101 = vpack.c.bf16 %v1035, %v1035
    %v1102 = vpack.c.bf16 %v1038, %v1038
    %v1103 = vpack.c.bf16 %v1093, %v1093
    %v1104 = vpack.c.bf16 %v1096, %v1096
    %s1105 = scalar_lea.vmem %s4, 16
    %v1106 = vld [vmem:[%s1105] sm:$0xff]
    %v1108 = vsel %vm217, %v1099, 0
    %v1111 = vsel %vm217, %v1101, 0
    %1113 = vmatprep.subr.bf16.mxu0 0
    %1114 = vmatpush1.bf16.xpose.msra.mxu0 0
    %1115 = vmatprep.subr.bf16.mxu0 0
    %1116 = vmatpush1.bf16.xpose.msra.mxu0 0
    %1117 = vmatprep.subr.bf16.mxu0 0
    %1118 = vmatpush1.bf16.xpose.msra.mxu0 0
    %1119 = vmatprep.subr.bf16.mxu0 0
    %1120 = vmatpush1.bf16.xpose.msra.mxu0 0
    %1121 = vmatprep.subr.bf16.mxu0 0
    %1122 = vmatpush1.bf16.xpose.msra.mxu0 0
    %1123 = vmatprep.subr.bf16.mxu0 0
    %1124 = vmatpush1.bf16.xpose.msra.mxu0 0
    %1125 = vmatprep.subr.bf16.mxu0 0
    %1126 = vmatpush1.bf16.xpose.msra.mxu0 0
    %1127 = vmatprep.subr.bf16.mxu0 0
    %1128 = vmatpush1.bf16.xpose.msra.mxu0 %v1111
    %1129 = vmatprep.subr.bf16.mxu0 0
    %1130 = vmatpush2.bf16.xpose.msra.mxu0 0
    %1131 = vmatprep.subr.bf16.mxu0 0
    %1132 = vmatpush2.bf16.xpose.msra.mxu0 0
    %1133 = vmatprep.subr.bf16.mxu0 0
    %1134 = vmatpush2.bf16.xpose.msra.mxu0 0
    %1135 = vmatprep.subr.bf16.mxu0 0
    %1136 = vmatpush2.bf16.xpose.msra.mxu0 0
    %1137 = vmatprep.subr.bf16.mxu0 0
    %1138 = vmatpush2.bf16.xpose.msra.mxu0 0
    %1139 = vmatprep.subr.bf16.mxu0 0
    %1140 = vmatpush2.bf16.xpose.msra.mxu0 0
    %1141 = vmatprep.subr.bf16.mxu0 0
    %1142 = vmatpush2.bf16.xpose.msra.mxu0 0
    %1143 = vmatprep.subr.bf16.mxu0 0
    %1144 = vmatpush2.bf16.xpose.msra.mxu0 0
    %1145 = vmatprep.mubr.bf16.mxu0 0
    %1146 = vmatmul.mubr.bf16.gmra.mxu0 %v1108
    %v1147 = vpop.f32.mrf.mxu0
    %v1148 = vadd.f32 %v1106, %v1147
    %v1149 = vpop.f32.mrf.mxu0
    %v1150 = vpop.f32.mrf.mxu0
    %v1151 = vpop.f32.mrf.mxu0
    %1152 = vdwg.mxu0
    %v1154 = vsel %vm217, %v1100, 0
    %v1157 = vsel %vm217, %v1102, 0
    %1159 = vmatprep.subr.bf16.mxu0 0
    %1160 = vmatpush1.bf16.xpose.msra.mxu0 0
    %1161 = vmatprep.subr.bf16.mxu0 0
    %1162 = vmatpush1.bf16.xpose.msra.mxu0 0
    %1163 = vmatprep.subr.bf16.mxu0 0
    %1164 = vmatpush1.bf16.xpose.msra.mxu0 0
    %1165 = vmatprep.subr.bf16.mxu0 0
    %1166 = vmatpush1.bf16.xpose.msra.mxu0 0
    %1167 = vmatprep.subr.bf16.mxu0 0
    %1168 = vmatpush1.bf16.xpose.msra.mxu0 0
    %1169 = vmatprep.subr.bf16.mxu0 0
    %1170 = vmatpush1.bf16.xpose.msra.mxu0 0
    %1171 = vmatprep.subr.bf16.mxu0 0
    %1172 = vmatpush1.bf16.xpose.msra.mxu0 0
    %1173 = vmatprep.subr.bf16.mxu0 0
    %1174 = vmatpush1.bf16.xpose.msra.mxu0 %v1157
    %1175 = vmatprep.subr.bf16.mxu0 0
    %1176 = vmatpush2.bf16.xpose.msra.mxu0 0
    %1177 = vmatprep.subr.bf16.mxu0 0
    %1178 = vmatpush2.bf16.xpose.msra.mxu0 0
    %1179 = vmatprep.subr.bf16.mxu0 0
    %1180 = vmatpush2.bf16.xpose.msra.mxu0 0
    %1181 = vmatprep.subr.bf16.mxu0 0
    %1182 = vmatpush2.bf16.xpose.msra.mxu0 0
    %1183 = vmatprep.subr.bf16.mxu0 0
    %1184 = vmatpush2.bf16.xpose.msra.mxu0 0
    %1185 = vmatprep.subr.bf16.mxu0 0
    %1186 = vmatpush2.bf16.xpose.msra.mxu0 0
    %1187 = vmatprep.subr.bf16.mxu0 0
    %1188 = vmatpush2.bf16.xpose.msra.mxu0 0
    %1189 = vmatprep.subr.bf16.mxu0 0
    %1190 = vmatpush2.bf16.xpose.msra.mxu0 0
    %1191 = vmatprep.mubr.bf16.mxu0 0
    %1192 = vmatmul.mubr.bf16.gmra.mxu0 %v1154
    %v1193 = vpop.f32.mrf.mxu0
    %v1194 = vadd.f32 %v1106, %v1193
    %v1195 = vpop.f32.mrf.mxu0
    %v1196 = vpop.f32.mrf.mxu0
    %v1197 = vpop.f32.mrf.mxu0
    %1198 = vdwg.mxu0
    %v1199 = vsel %vm310, %v1148, -inf
    %1200 = vmax.xlane.f32.xlu0 %v1199
    %v1201 = vpop.xlane.xlu0 %1200
    %v1202 = vsel %vm310, %v1194, -inf
    %1203 = vmax.xlane.f32.xlu0 %v1202
    %v1204 = vpop.xlane.xlu0 %1203
    %v1205 = vsub.f32 %v1148, %v1201
    %v1206 = vsub.f32 %v1194, %v1204
    %v1207 = vmul.f32 %v1205, 1.442695
    %v1208 = vpow.pop %v1207
    %v1209 = vmul.f32 %v1206, 1.442695
    %v1210 = vpow.pop %v1209
    %v1211 = vsel %vm310, %v1208, 0.0
    %1212 = vadd.xlane.f32.xlu0 %v1211
    %v1213 = vpop.xlane.xlu0 %1212
    %v1214 = vsel %vm310, %v1210, 0.0
    %1215 = vadd.xlane.f32.xlu0 %v1214
    %v1216 = vpop.xlane.xlu0 %1215
    %v1217 = vrcp.pop %v1213
    %v1218 = vrcp.pop %v1216
    %v1219 = vmul.f32 %v1208, %v1217
    %v1220 = vmul.f32 %v1210, %v1218
    %v1221 = vpack.c.bf16 %v1219, %v1219
    %v1222 = vpack.c.bf16 %v1220, %v1220
    %v1224 = vsel %vm310, %v1221, 0
    %v1227 = vsel %vm338, %v1103, 0
    %1229 = vmatprep.subr.bf16.mxu0 0
    %1230 = vmatpush1.bf16.msra.mxu0 0
    %1231 = vmatprep.subr.bf16.mxu0 0
    %1232 = vmatpush1.bf16.msra.mxu0 0
    %1233 = vmatprep.subr.bf16.mxu0 0
    %1234 = vmatpush1.bf16.msra.mxu0 0
    %1235 = vmatprep.subr.bf16.mxu0 0
    %1236 = vmatpush1.bf16.msra.mxu0 0
    %1237 = vmatprep.subr.bf16.mxu0 0
    %1238 = vmatpush1.bf16.msra.mxu0 0
    %1239 = vmatprep.subr.bf16.mxu0 0
    %1240 = vmatpush1.bf16.msra.mxu0 0
    %1241 = vmatprep.subr.bf16.mxu0 0
    %1242 = vmatpush1.bf16.msra.mxu0 0
    %1243 = vmatprep.subr.bf16.mxu0 0
    %1244 = vmatpush1.bf16.msra.mxu0 %v1227
    %1245 = vmatprep.subr.bf16.mxu0 0
    %1246 = vmatpush2.bf16.msra.mxu0 0
    %1247 = vmatprep.subr.bf16.mxu0 0
    %1248 = vmatpush2.bf16.msra.mxu0 0
    %1249 = vmatprep.subr.bf16.mxu0 0
    %1250 = vmatpush2.bf16.msra.mxu0 0
    %1251 = vmatprep.subr.bf16.mxu0 0
    %1252 = vmatpush2.bf16.msra.mxu0 0
    %1253 = vmatprep.subr.bf16.mxu0 0
    %1254 = vmatpush2.bf16.msra.mxu0 0
    %1255 = vmatprep.subr.bf16.mxu0 0
    %1256 = vmatpush2.bf16.msra.mxu0 0
    %1257 = vmatprep.subr.bf16.mxu0 0
    %1258 = vmatpush2.bf16.msra.mxu0 0
    %1259 = vmatprep.subr.bf16.mxu0 0
    %1260 = vmatpush2.bf16.msra.mxu0 0
    %1261 = vmatprep.mubr.bf16.mxu0 0
    %1262 = vmatmul.mubr.bf16.gmra.mxu0 %v1224
    %v1263 = vpop.f32.mrf.mxu0
    %v1264 = vadd.f32 0.0, %v1263
    %v1265 = vpop.f32.mrf.mxu0
    %v1266 = vpop.f32.mrf.mxu0
    %v1267 = vpop.f32.mrf.mxu0
    %1268 = vdwg.mxu0
    %v1270 = vsel %vm310, %v1222, 0
    %v1273 = vsel %vm338, %v1104, 0
    %1275 = vmatprep.subr.bf16.mxu0 0
    %1276 = vmatpush1.bf16.msra.mxu0 0
    %1277 = vmatprep.subr.bf16.mxu0 0
    %1278 = vmatpush1.bf16.msra.mxu0 0
    %1279 = vmatprep.subr.bf16.mxu0 0
    %1280 = vmatpush1.bf16.msra.mxu0 0
    %1281 = vmatprep.subr.bf16.mxu0 0
    %1282 = vmatpush1.bf16.msra.mxu0 0
    %1283 = vmatprep.subr.bf16.mxu0 0
    %1284 = vmatpush1.bf16.msra.mxu0 0
    %1285 = vmatprep.subr.bf16.mxu0 0
    %1286 = vmatpush1.bf16.msra.mxu0 0
    %1287 = vmatprep.subr.bf16.mxu0 0
    %1288 = vmatpush1.bf16.msra.mxu0 0
    %1289 = vmatprep.subr.bf16.mxu0 0
    %1290 = vmatpush1.bf16.msra.mxu0 %v1273
    %1291 = vmatprep.subr.bf16.mxu0 0
    %1292 = vmatpush2.bf16.msra.mxu0 0
    %1293 = vmatprep.subr.bf16.mxu0 0
    %1294 = vmatpush2.bf16.msra.mxu0 0
    %1295 = vmatprep.subr.bf16.mxu0 0
    %1296 = vmatpush2.bf16.msra.mxu0 0
    %1297 = vmatprep.subr.bf16.mxu0 0
    %1298 = vmatpush2.bf16.msra.mxu0 0
    %1299 = vmatprep.subr.bf16.mxu0 0
    %1300 = vmatpush2.bf16.msra.mxu0 0
    %1301 = vmatprep.subr.bf16.mxu0 0
    %1302 = vmatpush2.bf16.msra.mxu0 0
    %1303 = vmatprep.subr.bf16.mxu0 0
    %1304 = vmatpush2.bf16.msra.mxu0 0
    %1305 = vmatprep.subr.bf16.mxu0 0
    %1306 = vmatpush2.bf16.msra.mxu0 0
    %1307 = vmatprep.mubr.bf16.mxu0 0
    %1308 = vmatmul.mubr.bf16.gmra.mxu0 %v1270
    %v1309 = vpop.f32.mrf.mxu0
    %v1310 = vadd.f32 0.0, %v1309
    %v1311 = vpop.f32.mrf.mxu0
    %v1312 = vpop.f32.mrf.mxu0
    %v1313 = vpop.f32.mrf.mxu0
    %1314 = vdwg.mxu0
    %v1315 = vpack.c.bf16 %v1310, %v1264
    %s1316 = scalar_lea.vmem %s5, 16
    %v1317 = vld [vmem:[%s1316] sm:$0xf]
    %v1318 = vld [vmem:[%s1316 + $0x4] sm:$0xf]
    %v1321 = vunpack.c.l.b16 %v1317
    %v1322 = vunpack.c.l.b16 %v1318
    %v1323 = vpack.c.b16 %v1322, %v1321
    %v1326 = vsel %vm217, %v1315, 0
    %1328 = vmatprep.subr.bf16.mxu0 0
    %1329 = vmatpush1.bf16.msra.mxu0 0
    %1330 = vmatprep.subr.bf16.mxu0 0
    %1331 = vmatpush1.bf16.msra.mxu0 0
    %1332 = vmatprep.subr.bf16.mxu0 0
    %1333 = vmatpush1.bf16.msra.mxu0 0
    %1334 = vmatprep.subr.bf16.mxu0 0
    %1335 = vmatpush1.bf16.msra.mxu0 0
    %1336 = vmatprep.subr.bf16.mxu0 0
    %1337 = vmatpush1.bf16.msra.mxu0 0
    %1338 = vmatprep.subr.bf16.mxu0 0
    %1339 = vmatpush1.bf16.msra.mxu0 0
    %1340 = vmatprep.subr.bf16.mxu0 0
    %1341 = vmatpush1.bf16.msra.mxu0 0
    %1342 = vmatprep.subr.bf16.mxu0 0
    %1343 = vmatpush1.bf16.msra.mxu0 %v1323
    %1344 = vmatprep.subr.bf16.mxu0 0
    %1345 = vmatpush2.bf16.msra.mxu0 0
    %1346 = vmatprep.subr.bf16.mxu0 0
    %1347 = vmatpush2.bf16.msra.mxu0 0
    %1348 = vmatprep.subr.bf16.mxu0 0
    %1349 = vmatpush2.bf16.msra.mxu0 0
    %1350 = vmatprep.subr.bf16.mxu0 0
    %1351 = vmatpush2.bf16.msra.mxu0 0
    %1352 = vmatprep.subr.bf16.mxu0 0
    %1353 = vmatpush2.bf16.msra.mxu0 0
    %1354 = vmatprep.subr.bf16.mxu0 0
    %1355 = vmatpush2.bf16.msra.mxu0 0
    %1356 = vmatprep.subr.bf16.mxu0 0
    %1357 = vmatpush2.bf16.msra.mxu0 0
    %1358 = vmatprep.subr.bf16.mxu0 0
    %1359 = vmatpush2.bf16.msra.mxu0 0
    %1360 = vmatprep.mubr.bf16.mxu0 0
    %1361 = vmatmul.mubr.bf16.gmra.mxu0 %v1326
    %v1362 = vpop.f32.mrf.mxu0
    %v1363 = vadd.f32 0.0, %v1362
    %v1364 = vpop.f32.mrf.mxu0
    %v1365 = vpop.f32.mrf.mxu0
    %v1366 = vadd.f32 0.0, %v1365
    %v1367 = vpop.f32.mrf.mxu0
    %1368 = vdwg.mxu0
    %v1369 = vadd.f32 %v919, %v1363
    %v1370 = vadd.f32 %v922, %v1366
    %s1371 = scalar_lea.vmem %s1, 48
    %v1372 = vld [vmem:[%s1371] sm:$0xf]
    %v1373 = vld [vmem:[%s1371 + $0x4] sm:$0xf]
    %v1374 = vld [vmem:[%s1371 + $0x8] sm:$0xf]
    %v1375 = vld [vmem:[%s1371 + $0xc] sm:$0xf]
    %v1380 = vunpack.c.l.b16 %v1372
    %v1381 = vunpack.c.l.b16 %v1373
    %v1382 = vunpack.c.l.b16 %v1374
    %v1383 = vunpack.c.l.b16 %v1375
    %v1384 = vpack.c.b16 %v1381, %v1380
    %v1385 = vpack.c.b16 %v1383, %v1382
    %1388 = vmatprep.subr.bf16.mxu0 0
    %1389 = vmatpush1.bf16.msra.mxu0 0
    %1390 = vmatprep.subr.bf16.mxu0 0
    %1391 = vmatpush1.bf16.msra.mxu0 0
    %1392 = vmatprep.subr.bf16.mxu0 0
    %1393 = vmatpush1.bf16.msra.mxu0 0
    %1394 = vmatprep.subr.bf16.mxu0 0
    %1395 = vmatpush1.bf16.msra.mxu0 0
    %1396 = vmatprep.subr.bf16.mxu0 0
    %1397 = vmatpush1.bf16.msra.mxu0 0
    %1398 = vmatprep.subr.bf16.mxu0 0
    %1399 = vmatpush1.bf16.msra.mxu0 0
    %1400 = vmatprep.subr.bf16.mxu0 0
    %1401 = vmatpush1.bf16.msra.mxu0 %v1385
    %1402 = vmatprep.subr.bf16.mxu0 0
    %1403 = vmatpush1.bf16.msra.mxu0 %v1384
    %1404 = vmatprep.subr.bf16.mxu0 0
    %1405 = vmatpush2.bf16.msra.mxu0 0
    %1406 = vmatprep.subr.bf16.mxu0 0
    %1407 = vmatpush2.bf16.msra.mxu0 0
    %1408 = vmatprep.subr.bf16.mxu0 0
    %1409 = vmatpush2.bf16.msra.mxu0 0
    %1410 = vmatprep.subr.bf16.mxu0 0
    %1411 = vmatpush2.bf16.msra.mxu0 0
    %1412 = vmatprep.subr.bf16.mxu0 0
    %1413 = vmatpush2.bf16.msra.mxu0 0
    %1414 = vmatprep.subr.bf16.mxu0 0
    %1415 = vmatpush2.bf16.msra.mxu0 0
    %1416 = vmatprep.subr.bf16.mxu0 0
    %1417 = vmatpush2.bf16.msra.mxu0 0
    %1418 = vmatprep.subr.bf16.mxu0 0
    %1419 = vmatpush2.bf16.msra.mxu0 0
    %1420 = vmatprep.mubr.bf16.mxu0 0
    %1421 = vmatmul.mubr.bf16.gmra.mxu0 %v53
    %v1422 = vpop.f32.mrf.mxu0
    %v1423 = vadd.f32 0.0, %v1422
    %v1424 = vpop.f32.mrf.mxu0
    %v1425 = vpop.f32.mrf.mxu0
    %v1426 = vadd.f32 0.0, %v1425
    %v1427 = vpop.f32.mrf.mxu0
    %1428 = vdwg.mxu0
    %s1429 = scalar_lea.vmem %s2, 48
    %v1430 = vld [vmem:[%s1429] sm:$0xf]
    %v1431 = vld [vmem:[%s1429 + $0x4] sm:$0xf]
    %v1432 = vld [vmem:[%s1429 + $0x8] sm:$0xf]
    %v1433 = vld [vmem:[%s1429 + $0xc] sm:$0xf]
    %v1438 = vunpack.c.l.b16 %v1430
    %v1439 = vunpack.c.l.b16 %v1431
    %v1440 = vunpack.c.l.b16 %v1432
    %v1441 = vunpack.c.l.b16 %v1433
    %v1442 = vpack.c.b16 %v1439, %v1438
    %v1443 = vpack.c.b16 %v1441, %v1440
    %1446 = vmatprep.subr.bf16.mxu0 0
    %1447 = vmatpush1.bf16.msra.mxu0 0
    %1448 = vmatprep.subr.bf16.mxu0 0
    %1449 = vmatpush1.bf16.msra.mxu0 0
    %1450 = vmatprep.subr.bf16.mxu0 0
    %1451 = vmatpush1.bf16.msra.mxu0 0
    %1452 = vmatprep.subr.bf16.mxu0 0
    %1453 = vmatpush1.bf16.msra.mxu0 0
    %1454 = vmatprep.subr.bf16.mxu0 0
    %1455 = vmatpush1.bf16.msra.mxu0 0
    %1456 = vmatprep.subr.bf16.mxu0 0
    %1457 = vmatpush1.bf16.msra.mxu0 0
    %1458 = vmatprep.subr.bf16.mxu0 0
    %1459 = vmatpush1.bf16.msra.mxu0 %v1443
    %1460 = vmatprep.subr.bf16.mxu0 0
    %1461 = vmatpush1.bf16.msra.mxu0 %v1442
    %1462 = vmatprep.subr.bf16.mxu0 0
    %1463 = vmatpush2.bf16.msra.mxu0 0
    %1464 = vmatprep.subr.bf16.mxu0 0
    %1465 = vmatpush2.bf16.msra.mxu0 0
    %1466 = vmatprep.subr.bf16.mxu0 0
    %1467 = vmatpush2.bf16.msra.mxu0 0
    %1468 = vmatprep.subr.bf16.mxu0 0
    %1469 = vmatpush2.bf16.msra.mxu0 0
    %1470 = vmatprep.subr.bf16.mxu0 0
    %1471 = vmatpush2.bf16.msra.mxu0 0
    %1472 = vmatprep.subr.bf16.mxu0 0
    %1473 = vmatpush2.bf16.msra.mxu0 0
    %1474 = vmatprep.subr.bf16.mxu0 0
    %1475 = vmatpush2.bf16.msra.mxu0 0
    %1476 = vmatprep.subr.bf16.mxu0 0
    %1477 = vmatpush2.bf16.msra.mxu0 0
    %1478 = vmatprep.mubr.bf16.mxu0 0
    %1479 = vmatmul.mubr.bf16.gmra.mxu0 %v53
    %v1480 = vpop.f32.mrf.mxu0
    %v1481 = vadd.f32 0.0, %v1480
    %v1482 = vpop.f32.mrf.mxu0
    %v1483 = vpop.f32.mrf.mxu0
    %v1484 = vadd.f32 0.0, %v1483
    %v1485 = vpop.f32.mrf.mxu0
    %1486 = vdwg.mxu0
    %s1487 = scalar_lea.vmem %s3, 48
    %v1488 = vld [vmem:[%s1487] sm:$0xf]
    %v1489 = vld [vmem:[%s1487 + $0x4] sm:$0xf]
    %v1490 = vld [vmem:[%s1487 + $0x8] sm:$0xf]
    %v1491 = vld [vmem:[%s1487 + $0xc] sm:$0xf]
    %v1496 = vunpack.c.l.b16 %v1488
    %v1497 = vunpack.c.l.b16 %v1489
    %v1498 = vunpack.c.l.b16 %v1490
    %v1499 = vunpack.c.l.b16 %v1491
    %v1500 = vpack.c.b16 %v1497, %v1496
    %v1501 = vpack.c.b16 %v1499, %v1498
    %1504 = vmatprep.subr.bf16.mxu0 0
    %1505 = vmatpush1.bf16.msra.mxu0 0
    %1506 = vmatprep.subr.bf16.mxu0 0
    %1507 = vmatpush1.bf16.msra.mxu0 0
    %1508 = vmatprep.subr.bf16.mxu0 0
    %1509 = vmatpush1.bf16.msra.mxu0 0
    %1510 = vmatprep.subr.bf16.mxu0 0
    %1511 = vmatpush1.bf16.msra.mxu0 0
    %1512 = vmatprep.subr.bf16.mxu0 0
    %1513 = vmatpush1.bf16.msra.mxu0 0
    %1514 = vmatprep.subr.bf16.mxu0 0
    %1515 = vmatpush1.bf16.msra.mxu0 0
    %1516 = vmatprep.subr.bf16.mxu0 0
    %1517 = vmatpush1.bf16.msra.mxu0 %v1501
    %1518 = vmatprep.subr.bf16.mxu0 0
    %1519 = vmatpush1.bf16.msra.mxu0 %v1500
    %1520 = vmatprep.subr.bf16.mxu0 0
    %1521 = vmatpush2.bf16.msra.mxu0 0
    %1522 = vmatprep.subr.bf16.mxu0 0
    %1523 = vmatpush2.bf16.msra.mxu0 0
    %1524 = vmatprep.subr.bf16.mxu0 0
    %1525 = vmatpush2.bf16.msra.mxu0 0
    %1526 = vmatprep.subr.bf16.mxu0 0
    %1527 = vmatpush2.bf16.msra.mxu0 0
    %1528 = vmatprep.subr.bf16.mxu0 0
    %1529 = vmatpush2.bf16.msra.mxu0 0
    %1530 = vmatprep.subr.bf16.mxu0 0
    %1531 = vmatpush2.bf16.msra.mxu0 0
    %1532 = vmatprep.subr.bf16.mxu0 0
    %1533 = vmatpush2.bf16.msra.mxu0 0
    %1534 = vmatprep.subr.bf16.mxu0 0
    %1535 = vmatpush2.bf16.msra.mxu0 0
    %1536 = vmatprep.mubr.bf16.mxu0 0
    %1537 = vmatmul.mubr.bf16.gmra.mxu0 %v53
    %v1538 = vpop.f32.mrf.mxu0
    %v1539 = vadd.f32 0.0, %v1538
    %v1540 = vpop.f32.mrf.mxu0
    %v1541 = vpop.f32.mrf.mxu0
    %v1542 = vadd.f32 0.0, %v1541
    %v1543 = vpop.f32.mrf.mxu0
    %1544 = vdwg.mxu0
    %v1545 = vpack.c.bf16 %v1423, %v1423
    %v1546 = vpack.c.bf16 %v1426, %v1426
    %v1547 = vpack.c.bf16 %v1481, %v1481
    %v1548 = vpack.c.bf16 %v1484, %v1484
    %v1549 = vpack.c.bf16 %v1539, %v1539
    %v1550 = vpack.c.bf16 %v1542, %v1542
    %s1551 = scalar_lea.vmem %s4, 24
    %v1552 = vld [vmem:[%s1551] sm:$0xff]
    %v1554 = vsel %vm217, %v1545, 0
    %v1557 = vsel %vm217, %v1547, 0
    %1559 = vmatprep.subr.bf16.mxu0 0
    %1560 = vmatpush1.bf16.xpose.msra.mxu0 0
    %1561 = vmatprep.subr.bf16.mxu0 0
    %1562 = vmatpush1.bf16.xpose.msra.mxu0 0
    %1563 = vmatprep.subr.bf16.mxu0 0
    %1564 = vmatpush1.bf16.xpose.msra.mxu0 0
    %1565 = vmatprep.subr.bf16.mxu0 0
    %1566 = vmatpush1.bf16.xpose.msra.mxu0 0
    %1567 = vmatprep.subr.bf16.mxu0 0
    %1568 = vmatpush1.bf16.xpose.msra.mxu0 0
    %1569 = vmatprep.subr.bf16.mxu0 0
    %1570 = vmatpush1.bf16.xpose.msra.mxu0 0
    %1571 = vmatprep.subr.bf16.mxu0 0
    %1572 = vmatpush1.bf16.xpose.msra.mxu0 0
    %1573 = vmatprep.subr.bf16.mxu0 0
    %1574 = vmatpush1.bf16.xpose.msra.mxu0 %v1557
    %1575 = vmatprep.subr.bf16.mxu0 0
    %1576 = vmatpush2.bf16.xpose.msra.mxu0 0
    %1577 = vmatprep.subr.bf16.mxu0 0
    %1578 = vmatpush2.bf16.xpose.msra.mxu0 0
    %1579 = vmatprep.subr.bf16.mxu0 0
    %1580 = vmatpush2.bf16.xpose.msra.mxu0 0
    %1581 = vmatprep.subr.bf16.mxu0 0
    %1582 = vmatpush2.bf16.xpose.msra.mxu0 0
    %1583 = vmatprep.subr.bf16.mxu0 0
    %1584 = vmatpush2.bf16.xpose.msra.mxu0 0
    %1585 = vmatprep.subr.bf16.mxu0 0
    %1586 = vmatpush2.bf16.xpose.msra.mxu0 0
    %1587 = vmatprep.subr.bf16.mxu0 0
    %1588 = vmatpush2.bf16.xpose.msra.mxu0 0
    %1589 = vmatprep.subr.bf16.mxu0 0
    %1590 = vmatpush2.bf16.xpose.msra.mxu0 0
    %1591 = vmatprep.mubr.bf16.mxu0 0
    %1592 = vmatmul.mubr.bf16.gmra.mxu0 %v1554
    %v1593 = vpop.f32.mrf.mxu0
    %v1594 = vadd.f32 %v1552, %v1593
    %v1595 = vpop.f32.mrf.mxu0
    %v1596 = vpop.f32.mrf.mxu0
    %v1597 = vpop.f32.mrf.mxu0
    %1598 = vdwg.mxu0
    %v1600 = vsel %vm217, %v1546, 0
    %v1603 = vsel %vm217, %v1548, 0
    %1605 = vmatprep.subr.bf16.mxu0 0
    %1606 = vmatpush1.bf16.xpose.msra.mxu0 0
    %1607 = vmatprep.subr.bf16.mxu0 0
    %1608 = vmatpush1.bf16.xpose.msra.mxu0 0
    %1609 = vmatprep.subr.bf16.mxu0 0
    %1610 = vmatpush1.bf16.xpose.msra.mxu0 0
    %1611 = vmatprep.subr.bf16.mxu0 0
    %1612 = vmatpush1.bf16.xpose.msra.mxu0 0
    %1613 = vmatprep.subr.bf16.mxu0 0
    %1614 = vmatpush1.bf16.xpose.msra.mxu0 0
    %1615 = vmatprep.subr.bf16.mxu0 0
    %1616 = vmatpush1.bf16.xpose.msra.mxu0 0
    %1617 = vmatprep.subr.bf16.mxu0 0
    %1618 = vmatpush1.bf16.xpose.msra.mxu0 0
    %1619 = vmatprep.subr.bf16.mxu0 0
    %1620 = vmatpush1.bf16.xpose.msra.mxu0 %v1603
    %1621 = vmatprep.subr.bf16.mxu0 0
    %1622 = vmatpush2.bf16.xpose.msra.mxu0 0
    %1623 = vmatprep.subr.bf16.mxu0 0
    %1624 = vmatpush2.bf16.xpose.msra.mxu0 0
    %1625 = vmatprep.subr.bf16.mxu0 0
    %1626 = vmatpush2.bf16.xpose.msra.mxu0 0
    %1627 = vmatprep.subr.bf16.mxu0 0
    %1628 = vmatpush2.bf16.xpose.msra.mxu0 0
    %1629 = vmatprep.subr.bf16.mxu0 0
    %1630 = vmatpush2.bf16.xpose.msra.mxu0 0
    %1631 = vmatprep.subr.bf16.mxu0 0
    %1632 = vmatpush2.bf16.xpose.msra.mxu0 0
    %1633 = vmatprep.subr.bf16.mxu0 0
    %1634 = vmatpush2.bf16.xpose.msra.mxu0 0
    %1635 = vmatprep.subr.bf16.mxu0 0
    %1636 = vmatpush2.bf16.xpose.msra.mxu0 0
    %1637 = vmatprep.mubr.bf16.mxu0 0
    %1638 = vmatmul.mubr.bf16.gmra.mxu0 %v1600
    %v1639 = vpop.f32.mrf.mxu0
    %v1640 = vadd.f32 %v1552, %v1639
    %v1641 = vpop.f32.mrf.mxu0
    %v1642 = vpop.f32.mrf.mxu0
    %v1643 = vpop.f32.mrf.mxu0
    %1644 = vdwg.mxu0
    %v1645 = vsel %vm310, %v1594, -inf
    %1646 = vmax.xlane.f32.xlu0 %v1645
    %v1647 = vpop.xlane.xlu0 %1646
    %v1648 = vsel %vm310, %v1640, -inf
    %1649 = vmax.xlane.f32.xlu0 %v1648
    %v1650 = vpop.xlane.xlu0 %1649
    %v1651 = vsub.f32 %v1594, %v1647
    %v1652 = vsub.f32 %v1640, %v1650
    %v1653 = vmul.f32 %v1651, 1.442695
    %v1654 = vpow.pop %v1653
    %v1655 = vmul.f32 %v1652, 1.442695
    %v1656 = vpow.pop %v1655
    %v1657 = vsel %vm310, %v1654, 0.0
    %1658 = vadd.xlane.f32.xlu0 %v1657
    %v1659 = vpop.xlane.xlu0 %1658
    %v1660 = vsel %vm310, %v1656, 0.0
    %1661 = vadd.xlane.f32.xlu0 %v1660
    %v1662 = vpop.xlane.xlu0 %1661
    %v1663 = vrcp.pop %v1659
    %v1664 = vrcp.pop %v1662
    %v1665 = vmul.f32 %v1654, %v1663
    %v1666 = vmul.f32 %v1656, %v1664
    %v1667 = vpack.c.bf16 %v1665, %v1665
    %v1668 = vpack.c.bf16 %v1666, %v1666
    %v1670 = vsel %vm310, %v1667, 0
    %v1673 = vsel %vm338, %v1549, 0
    %1675 = vmatprep.subr.bf16.mxu0 0
    %1676 = vmatpush1.bf16.msra.mxu0 0
    %1677 = vmatprep.subr.bf16.mxu0 0
    %1678 = vmatpush1.bf16.msra.mxu0 0
    %1679 = vmatprep.subr.bf16.mxu0 0
    %1680 = vmatpush1.bf16.msra.mxu0 0
    %1681 = vmatprep.subr.bf16.mxu0 0
    %1682 = vmatpush1.bf16.msra.mxu0 0
    %1683 = vmatprep.subr.bf16.mxu0 0
    %1684 = vmatpush1.bf16.msra.mxu0 0
    %1685 = vmatprep.subr.bf16.mxu0 0
    %1686 = vmatpush1.bf16.msra.mxu0 0
    %1687 = vmatprep.subr.bf16.mxu0 0
    %1688 = vmatpush1.bf16.msra.mxu0 0
    %1689 = vmatprep.subr.bf16.mxu0 0
    %1690 = vmatpush1.bf16.msra.mxu0 %v1673
    %1691 = vmatprep.subr.bf16.mxu0 0
    %1692 = vmatpush2.bf16.msra.mxu0 0
    %1693 = vmatprep.subr.bf16.mxu0 0
    %1694 = vmatpush2.bf16.msra.mxu0 0
    %1695 = vmatprep.subr.bf16.mxu0 0
    %1696 = vmatpush2.bf16.msra.mxu0 0
    %1697 = vmatprep.subr.bf16.mxu0 0
    %1698 = vmatpush2.bf16.msra.mxu0 0
    %1699 = vmatprep.subr.bf16.mxu0 0
    %1700 = vmatpush2.bf16.msra.mxu0 0
    %1701 = vmatprep.subr.bf16.mxu0 0
    %1702 = vmatpush2.bf16.msra.mxu0 0
    %1703 = vmatprep.subr.bf16.mxu0 0
    %1704 = vmatpush2.bf16.msra.mxu0 0
    %1705 = vmatprep.subr.bf16.mxu0 0
    %1706 = vmatpush2.bf16.msra.mxu0 0
    %1707 = vmatprep.mubr.bf16.mxu0 0
    %1708 = vmatmul.mubr.bf16.gmra.mxu0 %v1670
    %v1709 = vpop.f32.mrf.mxu0
    %v1710 = vadd.f32 0.0, %v1709
    %v1711 = vpop.f32.mrf.mxu0
    %v1712 = vpop.f32.mrf.mxu0
    %v1713 = vpop.f32.mrf.mxu0
    %1714 = vdwg.mxu0
    %v1716 = vsel %vm310, %v1668, 0
    %v1719 = vsel %vm338, %v1550, 0
    %1721 = vmatprep.subr.bf16.mxu0 0
    %1722 = vmatpush1.bf16.msra.mxu0 0
    %1723 = vmatprep.subr.bf16.mxu0 0
    %1724 = vmatpush1.bf16.msra.mxu0 0
    %1725 = vmatprep.subr.bf16.mxu0 0
    %1726 = vmatpush1.bf16.msra.mxu0 0
    %1727 = vmatprep.subr.bf16.mxu0 0
    %1728 = vmatpush1.bf16.msra.mxu0 0
    %1729 = vmatprep.subr.bf16.mxu0 0
    %1730 = vmatpush1.bf16.msra.mxu0 0
    %1731 = vmatprep.subr.bf16.mxu0 0
    %1732 = vmatpush1.bf16.msra.mxu0 0
    %1733 = vmatprep.subr.bf16.mxu0 0
    %1734 = vmatpush1.bf16.msra.mxu0 0
    %1735 = vmatprep.subr.bf16.mxu0 0
    %1736 = vmatpush1.bf16.msra.mxu0 %v1719
    %1737 = vmatprep.subr.bf16.mxu0 0
    %1738 = vmatpush2.bf16.msra.mxu0 0
    %1739 = vmatprep.subr.bf16.mxu0 0
    %1740 = vmatpush2.bf16.msra.mxu0 0
    %1741 = vmatprep.subr.bf16.mxu0 0
    %1742 = vmatpush2.bf16.msra.mxu0 0
    %1743 = vmatprep.subr.bf16.mxu0 0
    %1744 = vmatpush2.bf16.msra.mxu0 0
    %1745 = vmatprep.subr.bf16.mxu0 0
    %1746 = vmatpush2.bf16.msra.mxu0 0
    %1747 = vmatprep.subr.bf16.mxu0 0
    %1748 = vmatpush2.bf16.msra.mxu0 0
    %1749 = vmatprep.subr.bf16.mxu0 0
    %1750 = vmatpush2.bf16.msra.mxu0 0
    %1751 = vmatprep.subr.bf16.mxu0 0
    %1752 = vmatpush2.bf16.msra.mxu0 0
    %1753 = vmatprep.mubr.bf16.mxu0 0
    %1754 = vmatmul.mubr.bf16.gmra.mxu0 %v1716
    %v1755 = vpop.f32.mrf.mxu0
    %v1756 = vadd.f32 0.0, %v1755
    %v1757 = vpop.f32.mrf.mxu0
    %v1758 = vpop.f32.mrf.mxu0
    %v1759 = vpop.f32.mrf.mxu0
    %1760 = vdwg.mxu0
    %v1761 = vpack.c.bf16 %v1756, %v1710
    %s1762 = scalar_lea.vmem %s5, 24
    %v1763 = vld [vmem:[%s1762] sm:$0xf]
    %v1764 = vld [vmem:[%s1762 + $0x4] sm:$0xf]
    %v1767 = vunpack.c.l.b16 %v1763
    %v1768 = vunpack.c.l.b16 %v1764
    %v1769 = vpack.c.b16 %v1768, %v1767
    %v1772 = vsel %vm217, %v1761, 0
    %1774 = vmatprep.subr.bf16.mxu0 0
    %1775 = vmatpush1.bf16.msra.mxu0 0
    %1776 = vmatprep.subr.bf16.mxu0 0
    %1777 = vmatpush1.bf16.msra.mxu0 0
    %1778 = vmatprep.subr.bf16.mxu0 0
    %1779 = vmatpush1.bf16.msra.mxu0 0
    %1780 = vmatprep.subr.bf16.mxu0 0
    %1781 = vmatpush1.bf16.msra.mxu0 0
    %1782 = vmatprep.subr.bf16.mxu0 0
    %1783 = vmatpush1.bf16.msra.mxu0 0
    %1784 = vmatprep.subr.bf16.mxu0 0
    %1785 = vmatpush1.bf16.msra.mxu0 0
    %1786 = vmatprep.subr.bf16.mxu0 0
    %1787 = vmatpush1.bf16.msra.mxu0 0
    %1788 = vmatprep.subr.bf16.mxu0 0
    %1789 = vmatpush1.bf16.msra.mxu0 %v1769
    %1790 = vmatprep.subr.bf16.mxu0 0
    %1791 = vmatpush2.bf16.msra.mxu0 0
    %1792 = vmatprep.subr.bf16.mxu0 0
    %1793 = vmatpush2.bf16.msra.mxu0 0
    %1794 = vmatprep.subr.bf16.mxu0 0
    %1795 = vmatpush2.bf16.msra.mxu0 0
    %1796 = vmatprep.subr.bf16.mxu0 0
    %1797 = vmatpush2.bf16.msra.mxu0 0
    %1798 = vmatprep.subr.bf16.mxu0 0
    %1799 = vmatpush2.bf16.msra.mxu0 0
    %1800 = vmatprep.subr.bf16.mxu0 0
    %1801 = vmatpush2.bf16.msra.mxu0 0
    %1802 = vmatprep.subr.bf16.mxu0 0
    %1803 = vmatpush2.bf16.msra.mxu0 0
    %1804 = vmatprep.subr.bf16.mxu0 0
    %1805 = vmatpush2.bf16.msra.mxu0 0
    %1806 = vmatprep.mubr.bf16.mxu0 0
    %1807 = vmatmul.mubr.bf16.gmra.mxu0 %v1772
    %v1808 = vpop.f32.mrf.mxu0
    %v1809 = vadd.f32 0.0, %v1808
    %v1810 = vpop.f32.mrf.mxu0
    %v1811 = vpop.f32.mrf.mxu0
    %v1812 = vadd.f32 0.0, %v1811
    %v1813 = vpop.f32.mrf.mxu0
    %1814 = vdwg.mxu0
    %v1815 = vadd.f32 %v1369, %v1809
    %v1816 = vadd.f32 %v1370, %v1812
    %v1817 = vld [vmem:[%s6] sm:$0x1]
    %v1819 = vlaneseq
    %v1820 = vshrl.u32 %v1819, 7
    %v1821 = vsub.s32 0, %v1820
    %v1822 = vrot.slane %v1817, %v1821
    %v1824 = vadd.f32 %v1815, %v1822
    %v1825 = vadd.f32 %v1816, %v1822
    %1826 = vst.msk [vmem:[#allocation2] sm:$0xff] %vm51, %v1824
    %1827 = vst.msk [vmem:[#allocation2 + $0x8] sm:$0xff] %vm51, %v1825
    // Predicated region
    $region30: #{tpu_custom_call.1} parent=1 // pred_check
      _
    $region31: #{tpu_custom_call.1} parent=1 // pred_check_branch
      %1829 = sbr.rel (0) target = $region33
    $region32: #{tpu_custom_call.1} parent=1 // pred_region
      %s1831 = ssub.s32 256, 256
      %1832 = vsyncadd [#allocation3], %s1831
      %s1833 = sshll.u32 [#allocation2], 4
      %s1834 = int_to_ptr.vmem [resolvable:$true] %s1833
      %1839 = dma.vmem_to_hbm [thread:$0]  %s1834, 256, %s7, [#allocation3], 128, 128, 8
    $region33: #{tpu_custom_call.1} parent=1 // pred_fallthru
      _
    // Predicated region
    $region34: #{tpu_custom_call.1} parent=1 // pred_check
      _
    $region35: #{tpu_custom_call.1} parent=1 // pred_check_branch
      %1841 = sbr.rel (0) target = $region37
    $region36: #{tpu_custom_call.1} parent=1 // pred_region
      %1842 = dma.done [#allocation3], 256
    $region37: #{tpu_custom_call.1} parent=1 // pred_fallthru
      _
    %1843 = vsyncpa [#allocation3], 1

</llo_original>
